<compile_context>
chip_gen: v7x
topology: tpu7x:2x2x1
jax: 0.10.0
libtpu: 0.0.40
codegen_flags: <defaults>
</compile_context>

<pallas_src>
import functools
import math

import jax
import jax.numpy as jnp
from jax import lax
from jax.experimental import pallas as pl
from jax.experimental.pallas import tpu as pltpu

RGLRU_C = 8.0     # Real_Gated_Linear_Recurrent_Unit.c
_CHUNK = 8        # timesteps per scan chunk (one fp32 sublane tile)


def _round_up(x, m):
    return (x + m - 1) // m * m


def _pick_block_b(batch, seq_pad, cap=16, target_rows=512):
    """Largest divisor of `batch` (<= cap) keeping Bb*T_pad around target_rows."""
    want = max(1, min(cap, target_rows // max(seq_pad, 1)))
    best = 1
    for d in range(1, want + 1):
        if batch % d == 0:
            best = d
    return best


# ----------------------------------------------------------------------------
# Fused Pallas kernel: one grid step == Bb batch rows, full sequence.
# ----------------------------------------------------------------------------
def _recurrent_block_kernel(
    x_ref,            # (Bb, T, D)      bf16
    w_in_ref,         # (D, Dr + H)     bf16   [p1 | p2@conv fused]
    b_in_ref,         # (1, Dr + H)     f32
    w_gate_ref,       # (H, 2H)         bf16   [Wa | Wx]
    b_gate_ref,       # (1, 2H)         f32
    coeff_ref,        # (1, H)          f32    -c * softplus(-Lambda)
    p3w_ref,          # (Dr, Dout)      bf16
    p3b_ref,          # (1, Dout)       f32
    o_ref,            # (Bb, T, Dout)   f32
    a_s, u_s, y_s,    # VMEM scratch, each (Bb*T_pad, H) f32
    *, bb, seq_len, seq_pad, d_rnn, hidden,
):
    f32, bf16 = jnp.float32, jnp.bfloat16
    m_rows = bb * seq_len

    x = x_ref[...].reshape(m_rows, x_ref.shape[-1])            # (M, D) bf16

    # ---- time-parallel matmuls ----------------------------------------------
    # p1 and the algebraically fused (p2 @ conv1d(k=1)) share one (D, Dr+H)
    # MXU matmul (N = Dr+H fills the 256-wide MXU on v6e/v7x).
    h = jnp.dot(x, w_in_ref[...], preferred_element_type=f32) + b_in_ref[...]
    # TODO(synk): nn.GELU() is the exact erf form; tanh approximation is used
    # here (erf lowering on Mosaic is not guaranteed), max abs diff ~3e-3.
    x1 = jax.nn.gelu(h[:, :d_rnn], approximate=True)           # (M, Dr)
    xt = jnp.maximum(h[:, d_rnn:], 0.0)                        # (M, H) conv(k=1)+ReLU

    # RG-LRU gate projections: Wa|Wx fused into one (H, 2H) matmul.
    gates = jnp.dot(xt.astype(bf16), w_gate_ref[...],
                    preferred_element_type=f32) + b_gate_ref[...]
    rt = jax.nn.sigmoid(gates[:, :hidden])
    it = jax.nn.sigmoid(gates[:, hidden:])

    a = jnp.exp(coeff_ref[...] * rt)                           # (M, H)
    u = jnp.sqrt(jnp.maximum(1.0 - a * a, 0.0)) * (it * xt)    # (M, H)

    # ---- stage a/u into scratch (batch-major rows, padded to CHUNK multiple)
    if seq_pad == seq_len:
        a_s[...] = a
        u_s[...] = u
    else:
        zpad = jnp.zeros((seq_pad - seq_len, hidden), f32)
        for b in range(bb):
            a_s[pl.ds(b * seq_pad, seq_len), :] = a[b * seq_len:(b + 1) * seq_len, :]
            u_s[pl.ds(b * seq_pad, seq_len), :] = u[b * seq_len:(b + 1) * seq_len, :]
            a_s[pl.ds(b * seq_pad + seq_len, seq_pad - seq_len), :] = zpad
            u_s[pl.ds(b * seq_pad + seq_len, seq_pad - seq_len), :] = zpad

    # ---- sequential RG-LRU recurrence: h_t = a_t * h_{t-1} + u_t -------------
    # Sublane-chunked Hillis-Steele scan: 8 timesteps per (8,H) block, three
    # roll+FMA levels (rolls land on the XLU slot), then fold in the carried
    # state.  Serial chain length is T/8 chunks instead of T row ld/FMA/st.
    n_chunks = seq_pad // _CHUNK
    row = lax.broadcasted_iota(jnp.int32, (_CHUNK, 1), 0)
    keep = tuple(row >= d for d in (1, 2, 4))

    def chunk_step(c, carries):
        new_carries = []
        for b in range(bb):
            off = pl.multiple_of(c * _CHUNK + b * seq_pad, _CHUNK)
            A = a_s[pl.ds(off, _CHUNK), :]                     # (8, H)
            U = u_s[pl.ds(off, _CHUNK), :]
            for lvl, d in enumerate((1, 2, 4)):
                A_sh = jnp.where(keep[lvl], pltpu.roll(A, d, axis=0), 1.0)
                U_sh = jnp.where(keep[lvl], pltpu.roll(U, d, axis=0), 0.0)
                U = A * U_sh + U                               # compose earlier∘later
                A = A * A_sh
            y_blk = U + A * carries[b]                         # fold in carried h
            y_s[pl.ds(off, _CHUNK), :] = y_blk
            new_carries.append(y_blk[_CHUNK - 1:_CHUNK, :])
        return tuple(new_carries)

    carries0 = tuple(jnp.zeros((1, hidden), f32) for _ in range(bb))
    lax.fori_loop(0, n_chunks, chunk_step, carries0, unroll=n_chunks <= 4)

    # ---- merge branches + p3 --------------------------------------------------
    if seq_pad == seq_len:
        y = y_s[...]
    else:
        y = y_s[...].reshape(bb, seq_pad, hidden)[:, :seq_len, :].reshape(m_rows, hidden)

    out = jnp.dot((x1 * y).astype(bf16), p3w_ref[...],
                  preferred_element_type=f32) + p3b_ref[...]   # (M, Dout)
    o_ref[...] = out.reshape(bb, seq_len, -1).astype(o_ref.dtype)


# ----------------------------------------------------------------------------
# Wrapper
# ----------------------------------------------------------------------------
def recurrent_block_forward(params, x, *, block_b=None):
    """x: (B, T, D) fp32 -> (B, T, D) fp32."""
    f32, bf16 = jnp.float32, jnp.bfloat16
    B, T, D = x.shape
    D_rnn = params["p1_w"].shape[1]
    H = params["conv_w"].shape[1]
    assert H == D_rnn, "x1 * x2 requires D_rnn == temporal_conv_output_dim"
    D_out = params["p3_w"].shape[1]

    T_pad = _round_up(T, _CHUNK)
    if block_b is None:
        block_b = _pick_block_b(B, T_pad)
    assert B % block_b == 0
    # TODO(synk): for very long sequences add a trailing "arbitrary" grid axis
    # over T with the recurrence carry held in persistent scratch, so the
    # per-step VMEM working set stays bounded (v7x has only 64 MiB VMEM).

    # ---- host-side weight fusion (exact, fp32) --------------------------------
    p2c_w = params["p2_w"].astype(f32) @ params["conv_w"].astype(f32)         # (D, H)
    p2c_b = (params["p2_b"].astype(f32) @ params["conv_w"].astype(f32)
             + params["conv_b"].astype(f32))                                  # (H,)
    w_in = jnp.concatenate([params["p1_w"].astype(f32), p2c_w], axis=1).astype(bf16)
    b_in = jnp.concatenate([params["p1_b"].astype(f32), p2c_b]).reshape(1, -1).astype(f32)
    w_gate = jnp.concatenate([params["rglru_wa"], params["rglru_wx"]], axis=1).astype(bf16)
    b_gate = jnp.concatenate([params["rglru_ba"], params["rglru_bx"]]).reshape(1, -1).astype(f32)
    neg_lam = -params["rglru_lambda"].astype(f32)
    softplus = jnp.where(neg_lam > 20.0, neg_lam, jnp.log1p(jnp.exp(neg_lam)))
    coeff = (-RGLRU_C * softplus).reshape(1, -1).astype(f32)                   # (1, H)
    p3_w = params["p3_w"].astype(bf16)
    p3_b = params["p3_b"].reshape(1, -1).astype(f32)

    kernel = functools.partial(
        _recurrent_block_kernel, bb=block_b, seq_len=T, seq_pad=T_pad,
        d_rnn=D_rnn, hidden=H)

    def wspec(shape):
        return pl.BlockSpec(shape, lambda i: (0, 0))      # stays VMEM-resident

    return pl.pallas_call(
        kernel,
        out_shape=jax.ShapeDtypeStruct((B, T, D_out), f32),
        grid_spec=pltpu.PrefetchScalarGridSpec(
            num_scalar_prefetch=0,
            grid=(B // block_b,),
            in_specs=[
                pl.BlockSpec((block_b, T, D), lambda i: (i, 0, 0)),
                wspec((D, D_rnn + H)), wspec((1, D_rnn + H)),
                wspec((H, 2 * H)), wspec((1, 2 * H)),
                wspec((1, H)),
                wspec((D_rnn, D_out)), wspec((1, D_out)),
            ],
            out_specs=pl.BlockSpec((block_b, T, D_out), lambda i: (i, 0, 0)),
            scratch_shapes=[pltpu.VMEM((block_b * T_pad, H), f32)] * 3,
        ),
        compiler_params=pltpu.CompilerParams(
            dimension_semantics=("parallel",)),
    )(x.astype(bf16), w_in, b_in, w_gate, b_gate, coeff, p3_w, p3_b)


# ----------------------------------------------------------------------------
# Parameters (PyTorch-equivalent initialization) and fp32 reference
# ----------------------------------------------------------------------------
def init_params(key, input_dim, d_rnn, conv_out_dim, kernel_size=1):
    # TODO(synk): kernel_size > 1 with padding=0 changes the sequence length and
    # breaks x1 * x2 in the reference module too; only k=1 is supported.
    assert kernel_size == 1
    assert conv_out_dim == d_rnn
    ks = jax.random.split(key, 11)
    f32 = jnp.float32

    def linear_init(kw, kb, fan_in, shape_w, shape_b):
        bound = 1.0 / math.sqrt(fan_in)
        w = jax.random.uniform(kw, shape_w, f32, -bound, bound)
        b = jax.random.uniform(kb, shape_b, f32, -bound, bound)
        return w, b

    p1_w, p1_b = linear_init(ks[0], ks[1], input_dim, (input_dim, d_rnn), (d_rnn,))
    p2_w, p2_b = linear_init(ks[2], ks[3], input_dim, (input_dim, d_rnn), (d_rnn,))
    conv_w, conv_b = linear_init(ks[4], ks[5], d_rnn * kernel_size,
                                 (d_rnn, conv_out_dim), (conv_out_dim,))
    std = 1.0 / math.sqrt(conv_out_dim)
    wa = std * jax.random.normal(ks[6], (conv_out_dim, conv_out_dim), f32)
    wx = std * jax.random.normal(ks[7], (conv_out_dim, conv_out_dim), f32)
    lam_u = jax.random.uniform(ks[8], (conv_out_dim,), f32, 0.9, 0.999)
    lam = -jnp.log(lam_u ** (-1.0 / RGLRU_C) - 1.0)
    p3_w, p3_b = linear_init(ks[9], ks[10], d_rnn, (d_rnn, input_dim), (input_dim,))

    return {
        "p1_w": p1_w, "p1_b": p1_b,
        "p2_w": p2_w, "p2_b": p2_b,
        "conv_w": conv_w, "conv_b": conv_b,
        "rglru_wa": wa, "rglru_ba": jnp.zeros((conv_out_dim,), f32),
        "rglru_wx": wx, "rglru_bx": jnp.zeros((conv_out_dim,), f32),
        "rglru_lambda": lam,
        "p3_w": p3_w, "p3_b": p3_b,
    }


def reference_forward(params, x):
    """Pure-JAX fp32 reference matching the PyTorch forward."""
    f32 = jnp.float32
    x = x.astype(f32)
    x1 = jax.nn.gelu(x @ params["p1_w"] + params["p1_b"], approximate=False)
    h2 = x @ params["p2_w"] + params["p2_b"]
    xt = jax.nn.relu(h2 @ params["conv_w"] + params["conv_b"])
    rt = jax.nn.sigmoid(xt @ params["rglru_wa"] + params["rglru_ba"])
    it = jax.nn.sigmoid(xt @ params["rglru_wx"] + params["rglru_bx"])
    neg_lam = -params["rglru_lambda"]
    sp = jnp.where(neg_lam > 20.0, neg_lam, jnp.log1p(jnp.exp(neg_lam)))
    a = jnp.exp(-RGLRU_C * sp * rt)
    u = jnp.sqrt(jnp.maximum(1.0 - a * a, 0.0)) * (it * xt)

    def step(h, au):
        a_t, u_t = au
        h = a_t * h + u_t
        return h, h

    B, _, H = a.shape
    _, y = jax.lax.scan(step, jnp.zeros((B, H), f32),
                        (jnp.swapaxes(a, 0, 1), jnp.swapaxes(u, 0, 1)))
    y = jnp.swapaxes(y, 0, 1)
    return (x1 * y) @ params["p3_w"] + params["p3_b"]


if __name__ == "__main__":
    key = jax.random.PRNGKey(0)
    pkey, xkey = jax.random.split(key)

    B, T, D, D_rnn = 4, 16, 32, 128       # batch, seq, input_dim, D_rnn == conv_out
    params = init_params(pkey, input_dim=D, d_rnn=D_rnn, conv_out_dim=D_rnn)
    x = jax.random.normal(xkey, (B, T, D), jnp.float32)

    out = jax.jit(recurrent_block_forward)(params, x)
    jax.block_until_ready(out)
    assert out.shape == (B, T, D), out.shape

    ref = reference_forward(params, x)
    err = float(jnp.max(jnp.abs(out - ref)))
    assert err < 5e-2, f"max abs error vs fp32 reference: {err}"
    print("KERNEL_OK")
</pallas_src>

<mosaic_0001>
module attributes {stable_mosaic.version = 11 : i64} {
  func.func @_recurrent_block_kernel(%arg0: i32, %arg1: memref<4x16x32xbf16, #tpu.memory_space<vmem>>, %arg2: memref<32x256xbf16, #tpu.memory_space<vmem>>, %arg3: memref<1x256xf32, #tpu.memory_space<vmem>>, %arg4: memref<128x256xbf16, #tpu.memory_space<vmem>>, %arg5: memref<1x256xf32, #tpu.memory_space<vmem>>, %arg6: memref<1x128xf32, #tpu.memory_space<vmem>>, %arg7: memref<128x32xbf16, #tpu.memory_space<vmem>>, %arg8: memref<1x32xf32, #tpu.memory_space<vmem>>, %arg9: memref<4x16x32xf32, #tpu.memory_space<vmem>>, %arg10: memref<64x128xf32, #tpu.memory_space<vmem>>, %arg11: memref<64x128xf32, #tpu.memory_space<vmem>>, %arg12: memref<64x128xf32, #tpu.memory_space<vmem>>) attributes {dimension_semantics = [#tpu.dimension_semantics<parallel>], iteration_bounds = array<i64: 1>, scalar_prefetch = 0 : i64, scratch_operands = 3 : i64, tpu.core_type = #tpu.core_type<tc>, window_params = [{transform_indices = @transform_0, window_bounds = array<i64: 4, 16, 32>}, {pipeline_mode = #tpu.pipeline_mode<synchronous>, transform_indices = @transform_1, window_bounds = array<i64: 32, 256>}, {pipeline_mode = #tpu.pipeline_mode<synchronous>, transform_indices = @transform_2, window_bounds = array<i64: 1, 256>}, {pipeline_mode = #tpu.pipeline_mode<synchronous>, transform_indices = @transform_3, window_bounds = array<i64: 128, 256>}, {pipeline_mode = #tpu.pipeline_mode<synchronous>, transform_indices = @transform_4, window_bounds = array<i64: 1, 256>}, {pipeline_mode = #tpu.pipeline_mode<synchronous>, transform_indices = @transform_5, window_bounds = array<i64: 1, 128>}, {pipeline_mode = #tpu.pipeline_mode<synchronous>, transform_indices = @transform_6, window_bounds = array<i64: 128, 32>}, {pipeline_mode = #tpu.pipeline_mode<synchronous>, transform_indices = @transform_7, window_bounds = array<i64: 1, 32>}, {transform_indices = @transform_8, window_bounds = array<i64: 4, 16, 32>}]} {
    %c0 = arith.constant 0 : index
    %c0_0 = arith.constant 0 : index
    %c0_1 = arith.constant 0 : index
    %0 = vector.load %arg1[%c0, %c0_0, %c0_1] : memref<4x16x32xbf16, #tpu.memory_space<vmem>>, vector<4x16x32xbf16>
    %1 = vector.shape_cast %0 : vector<4x16x32xbf16> to vector<64x32xbf16>
    %c0_2 = arith.constant 0 : index
    %c0_3 = arith.constant 0 : index
    %2 = vector.load %arg2[%c0_2, %c0_3] : memref<32x256xbf16, #tpu.memory_space<vmem>>, vector<32x256xbf16>
    %cst = arith.constant dense<0.000000e+00> : vector<64x256xf32>
    %3 = tpu.matmul %1, %2, %cst {dimension_numbers = #tpu.dot_dimension_numbers<[1], [0], [0], [1], [0, 0, 1, 1], [], []>} : vector<64x32xbf16>, vector<32x256xbf16>, vector<64x256xf32> -> vector<64x256xf32>
    %c0_4 = arith.constant 0 : index
    %c0_5 = arith.constant 0 : index
    %4 = vector.load %arg3[%c0_4, %c0_5] : memref<1x256xf32, #tpu.memory_space<vmem>>, vector<1x256xf32>
    %5 = vector.broadcast %4 : vector<1x256xf32> to vector<64x256xf32>
    %6 = arith.addf %3, %5 : vector<64x256xf32>
    %7 = vector.extract_strided_slice %6 {offsets = [0, 0], sizes = [64, 128], strides = [1, 1]} : vector<64x256xf32> to vector<64x128xf32>
    %8 = arith.mulf %7, %7 : vector<64x128xf32>
    %9 = arith.mulf %7, %8 : vector<64x128xf32>
    %cst_6 = arith.constant 4.471500e-02 : f32
    %10 = vector.broadcast %cst_6 : f32 to vector<64x128xf32>
    %11 = arith.mulf %10, %9 : vector<64x128xf32>
    %12 = arith.addf %7, %11 : vector<64x128xf32>
    %cst_7 = arith.constant 0.797884583 : f32
    %13 = vector.broadcast %cst_7 : f32 to vector<64x128xf32>
    %14 = arith.mulf %13, %12 : vector<64x128xf32>
    %15 = math.tanh %14 : vector<64x128xf32>
    %cst_8 = arith.constant 1.000000e+00 : f32
    %16 = vector.broadcast %cst_8 : f32 to vector<64x128xf32>
    %17 = arith.addf %16, %15 : vector<64x128xf32>
    %cst_9 = arith.constant 5.000000e-01 : f32
    %18 = vector.broadcast %cst_9 : f32 to vector<64x128xf32>
    %19 = arith.mulf %18, %17 : vector<64x128xf32>
    %20 = arith.mulf %7, %19 : vector<64x128xf32>
    %21 = vector.extract_strided_slice %6 {offsets = [0, 128], sizes = [64, 128], strides = [1, 1]} : vector<64x256xf32> to vector<64x128xf32>
    %cst_10 = arith.constant 0.000000e+00 : f32
    %22 = vector.broadcast %cst_10 : f32 to vector<64x128xf32>
    %23 = arith.maximumf %21, %22 : vector<64x128xf32>
    %24 = arith.truncf %23 : vector<64x128xf32> to vector<64x128xbf16>
    %c0_11 = arith.constant 0 : index
    %c0_12 = arith.constant 0 : index
    %25 = vector.load %arg4[%c0_11, %c0_12] : memref<128x256xbf16, #tpu.memory_space<vmem>>, vector<128x256xbf16>
    %cst_13 = arith.constant dense<0.000000e+00> : vector<64x256xf32>
    %26 = tpu.matmul %24, %25, %cst_13 {dimension_numbers = #tpu.dot_dimension_numbers<[1], [0], [0], [1], [0, 0, 1, 1], [], []>} : vector<64x128xbf16>, vector<128x256xbf16>, vector<64x256xf32> -> vector<64x256xf32>
    %c0_14 = arith.constant 0 : index
    %c0_15 = arith.constant 0 : index
    %27 = vector.load %arg5[%c0_14, %c0_15] : memref<1x256xf32, #tpu.memory_space<vmem>>, vector<1x256xf32>
    %28 = vector.broadcast %27 : vector<1x256xf32> to vector<64x256xf32>
    %29 = arith.addf %26, %28 : vector<64x256xf32>
    %30 = vector.extract_strided_slice %29 {offsets = [0, 0], sizes = [64, 128], strides = [1, 1]} : vector<64x256xf32> to vector<64x128xf32>
    %31 = arith.negf %30 : vector<64x128xf32>
    %32 = math.exp %31 : vector<64x128xf32>
    %cst_16 = arith.constant 1.000000e+00 : f32
    %33 = vector.broadcast %cst_16 : f32 to vector<64x128xf32>
    %34 = arith.addf %33, %32 : vector<64x128xf32>
    %35 = arith.divf %33, %34 : vector<64x128xf32>
    %36 = vector.extract_strided_slice %29 {offsets = [0, 128], sizes = [64, 128], strides = [1, 1]} : vector<64x256xf32> to vector<64x128xf32>
    %37 = arith.negf %36 : vector<64x128xf32>
    %38 = math.exp %37 : vector<64x128xf32>
    %cst_17 = arith.constant 1.000000e+00 : f32
    %39 = vector.broadcast %cst_17 : f32 to vector<64x128xf32>
    %40 = arith.addf %39, %38 : vector<64x128xf32>
    %41 = arith.divf %39, %40 : vector<64x128xf32>
    %c0_18 = arith.constant 0 : index
    %c0_19 = arith.constant 0 : index
    %42 = vector.load %arg6[%c0_18, %c0_19] : memref<1x128xf32, #tpu.memory_space<vmem>>, vector<1x128xf32>
    %43 = vector.broadcast %42 : vector<1x128xf32> to vector<64x128xf32>
    %44 = arith.mulf %43, %35 : vector<64x128xf32>
    %45 = math.exp %44 : vector<64x128xf32>
    %46 = arith.mulf %45, %45 : vector<64x128xf32>
    %cst_20 = arith.constant 1.000000e+00 : f32
    %47 = vector.broadcast %cst_20 : f32 to vector<64x128xf32>
    %48 = arith.subf %47, %46 : vector<64x128xf32>
    %cst_21 = arith.constant 0.000000e+00 : f32
    %49 = vector.broadcast %cst_21 : f32 to vector<64x128xf32>
    %50 = arith.maximumf %48, %49 : vector<64x128xf32>
    %51 = math.sqrt %50 : vector<64x128xf32>
    %52 = arith.mulf %41, %23 : vector<64x128xf32>
    %53 = arith.mulf %51, %52 : vector<64x128xf32>
    %c0_22 = arith.constant 0 : index
    %c0_23 = arith.constant 0 : index
    %54 = vector.load %arg10[%c0_22, %c0_23] : memref<64x128xf32, #tpu.memory_space<vmem>>, vector<64x128xf32>
    tpu.vector_store %arg10[%c0_22, %c0_23], %45 {strides = array<i32>} : memref<64x128xf32, #tpu.memory_space<vmem>>, vector<64x128xf32>,
    %c0_24 = arith.constant 0 : index
    %c0_25 = arith.constant 0 : index
    %55 = vector.load %arg11[%c0_24, %c0_25] : memref<64x128xf32, #tpu.memory_space<vmem>>, vector<64x128xf32>
    tpu.vector_store %arg11[%c0_24, %c0_25], %53 {strides = array<i32>} : memref<64x128xf32, #tpu.memory_space<vmem>>, vector<64x128xf32>,
    %56 = tpu.iota {dimensions = array<i32: 0>} : vector<8x1xi32>
    %c1_i32 = arith.constant 1 : i32
    %57 = vector.broadcast %c1_i32 : i32 to vector<8x1xi32>
    %58 = arith.cmpi sge, %56, %57 : vector<8x1xi32>
    %c2_i32 = arith.constant 2 : i32
    %59 = vector.broadcast %c2_i32 : i32 to vector<8x1xi32>
    %60 = arith.cmpi sge, %56, %59 : vector<8x1xi32>
    %c4_i32 = arith.constant 4 : i32
    %61 = vector.broadcast %c4_i32 : i32 to vector<8x1xi32>
    %62 = arith.cmpi sge, %56, %61 : vector<8x1xi32>
    %cst_26 = arith.constant 0.000000e+00 : f32
    %63 = vector.broadcast %cst_26 : f32 to vector<1x128xf32>
    %cst_27 = arith.constant 0.000000e+00 : f32
    %64 = vector.broadcast %cst_27 : f32 to vector<1x128xf32>
    %cst_28 = arith.constant 0.000000e+00 : f32
    %65 = vector.broadcast %cst_28 : f32 to vector<1x128xf32>
    %cst_29 = arith.constant 0.000000e+00 : f32
    %66 = vector.broadcast %cst_29 : f32 to vector<1x128xf32>
    %c0_i32 = arith.constant 0 : i32
    %c8_i32 = arith.constant 8 : i32
    %67 = arith.muli %c0_i32, %c8_i32 : i32
    %c0_i32_30 = arith.constant 0 : i32
    %68 = arith.addi %67, %c0_i32_30 : i32
    %69 = tpu.assume_multiple %68, 8 : i32
    %70 = arith.index_cast %69 : i32 to index
    %c0_31 = arith.constant 0 : index
    %71 = vector.load %arg10[%70, %c0_31] : memref<64x128xf32, #tpu.memory_space<vmem>>, vector<8x128xf32>
    %72 = arith.index_cast %69 : i32 to index
    %c0_32 = arith.constant 0 : index
    %73 = vector.load %arg11[%72, %c0_32] : memref<64x128xf32, #tpu.memory_space<vmem>>, vector<8x128xf32>
    %c1_i32_33 = arith.constant 1 : i32
    %74 = tpu.dynamic_rotate %71 by %c1_i32_33 dim 0 : vector<8x128xf32>, i32 -> vector<8x128xf32>
    %cst_34 = arith.constant 1.000000e+00 : f32
    %75 = vector.shape_cast %58 : vector<8x1xi1> to vector<8x1xi1>
    %76 = vector.broadcast %75 : vector<8x1xi1> to vector<8x128xi1>
    %77 = vector.broadcast %cst_34 : f32 to vector<8x128xf32>
    %78 = arith.select %76, %74, %77 : vector<8x128xi1>, vector<8x128xf32>
    %c1_i32_35 = arith.constant 1 : i32
    %79 = tpu.dynamic_rotate %73 by %c1_i32_35 dim 0 : vector<8x128xf32>, i32 -> vector<8x128xf32>
    %cst_36 = arith.constant 0.000000e+00 : f32
    %80 = vector.shape_cast %58 : vector<8x1xi1> to vector<8x1xi1>
    %81 = vector.broadcast %80 : vector<8x1xi1> to vector<8x128xi1>
    %82 = vector.broadcast %cst_36 : f32 to vector<8x128xf32>
    %83 = arith.select %81, %79, %82 : vector<8x128xi1>, vector<8x128xf32>
    %84 = arith.mulf %71, %83 : vector<8x128xf32>
    %85 = arith.addf %84, %73 : vector<8x128xf32>
    %86 = arith.mulf %71, %78 : vector<8x128xf32>
    %c2_i32_37 = arith.constant 2 : i32
    %87 = tpu.dynamic_rotate %86 by %c2_i32_37 dim 0 : vector<8x128xf32>, i32 -> vector<8x128xf32>
    %cst_38 = arith.constant 1.000000e+00 : f32
    %88 = vector.shape_cast %60 : vector<8x1xi1> to vector<8x1xi1>
    %89 = vector.broadcast %88 : vector<8x1xi1> to vector<8x128xi1>
    %90 = vector.broadcast %cst_38 : f32 to vector<8x128xf32>
    %91 = arith.select %89, %87, %90 : vector<8x128xi1>, vector<8x128xf32>
    %c2_i32_39 = arith.constant 2 : i32
    %92 = tpu.dynamic_rotate %85 by %c2_i32_39 dim 0 : vector<8x128xf32>, i32 -> vector<8x128xf32>
    %cst_40 = arith.constant 0.000000e+00 : f32
    %93 = vector.shape_cast %60 : vector<8x1xi1> to vector<8x1xi1>
    %94 = vector.broadcast %93 : vector<8x1xi1> to vector<8x128xi1>
    %95 = vector.broadcast %cst_40 : f32 to vector<8x128xf32>
    %96 = arith.select %94, %92, %95 : vector<8x128xi1>, vector<8x128xf32>
    %97 = arith.mulf %86, %96 : vector<8x128xf32>
    %98 = arith.addf %97, %85 : vector<8x128xf32>
    %99 = arith.mulf %86, %91 : vector<8x128xf32>
    %c4_i32_41 = arith.constant 4 : i32
    %100 = tpu.dynamic_rotate %99 by %c4_i32_41 dim 0 : vector<8x128xf32>, i32 -> vector<8x128xf32>
    %cst_42 = arith.constant 1.000000e+00 : f32
    %101 = vector.shape_cast %62 : vector<8x1xi1> to vector<8x1xi1>
    %102 = vector.broadcast %101 : vector<8x1xi1> to vector<8x128xi1>
    %103 = vector.broadcast %cst_42 : f32 to vector<8x128xf32>
    %104 = arith.select %102, %100, %103 : vector<8x128xi1>, vector<8x128xf32>
    %c4_i32_43 = arith.constant 4 : i32
    %105 = tpu.dynamic_rotate %98 by %c4_i32_43 dim 0 : vector<8x128xf32>, i32 -> vector<8x128xf32>
    %cst_44 = arith.constant 0.000000e+00 : f32
    %106 = vector.shape_cast %62 : vector<8x1xi1> to vector<8x1xi1>
    %107 = vector.broadcast %106 : vector<8x1xi1> to vector<8x128xi1>
    %108 = vector.broadcast %cst_44 : f32 to vector<8x128xf32>
    %109 = arith.select %107, %105, %108 : vector<8x128xi1>, vector<8x128xf32>
    %110 = arith.mulf %99, %109 : vector<8x128xf32>
    %111 = arith.addf %110, %98 : vector<8x128xf32>
    %112 = arith.mulf %99, %104 : vector<8x128xf32>
    %113 = vector.broadcast %63 : vector<1x128xf32> to vector<8x128xf32>
    %114 = arith.mulf %112, %113 : vector<8x128xf32>
    %115 = arith.addf %111, %114 : vector<8x128xf32>
    %116 = arith.index_cast %69 : i32 to index
    %c0_45 = arith.constant 0 : index
    %117 = vector.load %arg12[%116, %c0_45] : memref<64x128xf32, #tpu.memory_space<vmem>>, vector<8x128xf32>
    tpu.vector_store %arg12[%116, %c0_45], %115 {strides = array<i32>} : memref<64x128xf32, #tpu.memory_space<vmem>>, vector<8x128xf32>,
    %118 = vector.extract_strided_slice %115 {offsets = [7, 0], sizes = [1, 128], strides = [1, 1]} : vector<8x128xf32> to vector<1x128xf32>
    %c8_i32_46 = arith.constant 8 : i32
    %119 = arith.muli %c0_i32, %c8_i32_46 : i32
    %c16_i32 = arith.constant 16 : i32
    %120 = arith.addi %119, %c16_i32 : i32
    %121 = tpu.assume_multiple %120, 8 : i32
    %122 = arith.index_cast %121 : i32 to index
    %c0_47 = arith.constant 0 : index
    %123 = vector.load %arg10[%122, %c0_47] : memref<64x128xf32, #tpu.memory_space<vmem>>, vector<8x128xf32>
    %124 = arith.index_cast %121 : i32 to index
    %c0_48 = arith.constant 0 : index
    %125 = vector.load %arg11[%124, %c0_48] : memref<64x128xf32, #tpu.memory_space<vmem>>, vector<8x128xf32>
    %c1_i32_49 = arith.constant 1 : i32
    %126 = tpu.dynamic_rotate %123 by %c1_i32_49 dim 0 : vector<8x128xf32>, i32 -> vector<8x128xf32>
    %cst_50 = arith.constant 1.000000e+00 : f32
    %127 = vector.shape_cast %58 : vector<8x1xi1> to vector<8x1xi1>
    %128 = vector.broadcast %127 : vector<8x1xi1> to vector<8x128xi1>
    %129 = vector.broadcast %cst_50 : f32 to vector<8x128xf32>
    %130 = arith.select %128, %126, %129 : vector<8x128xi1>, vector<8x128xf32>
    %c1_i32_51 = arith.constant 1 : i32
    %131 = tpu.dynamic_rotate %125 by %c1_i32_51 dim 0 : vector<8x128xf32>, i32 -> vector<8x128xf32>
    %cst_52 = arith.constant 0.000000e+00 : f32
    %132 = vector.shape_cast %58 : vector<8x1xi1> to vector<8x1xi1>
    %133 = vector.broadcast %132 : vector<8x1xi1> to vector<8x128xi1>
    %134 = vector.broadcast %cst_52 : f32 to vector<8x128xf32>
    %135 = arith.select %133, %131, %134 : vector<8x128xi1>, vector<8x128xf32>
    %136 = arith.mulf %123, %135 : vector<8x128xf32>
    %137 = arith.addf %136, %125 : vector<8x128xf32>
    %138 = arith.mulf %123, %130 : vector<8x128xf32>
    %c2_i32_53 = arith.constant 2 : i32
    %139 = tpu.dynamic_rotate %138 by %c2_i32_53 dim 0 : vector<8x128xf32>, i32 -> vector<8x128xf32>
    %cst_54 = arith.constant 1.000000e+00 : f32
    %140 = vector.shape_cast %60 : vector<8x1xi1> to vector<8x1xi1>
    %141 = vector.broadcast %140 : vector<8x1xi1> to vector<8x128xi1>
    %142 = vector.broadcast %cst_54 : f32 to vector<8x128xf32>
    %143 = arith.select %141, %139, %142 : vector<8x128xi1>, vector<8x128xf32>
    %c2_i32_55 = arith.constant 2 : i32
    %144 = tpu.dynamic_rotate %137 by %c2_i32_55 dim 0 : vector<8x128xf32>, i32 -> vector<8x128xf32>
    %cst_56 = arith.constant 0.000000e+00 : f32
    %145 = vector.shape_cast %60 : vector<8x1xi1> to vector<8x1xi1>
    %146 = vector.broadcast %145 : vector<8x1xi1> to vector<8x128xi1>
    %147 = vector.broadcast %cst_56 : f32 to vector<8x128xf32>
    %148 = arith.select %146, %144, %147 : vector<8x128xi1>, vector<8x128xf32>
    %149 = arith.mulf %138, %148 : vector<8x128xf32>
    %150 = arith.addf %149, %137 : vector<8x128xf32>
    %151 = arith.mulf %138, %143 : vector<8x128xf32>
    %c4_i32_57 = arith.constant 4 : i32
    %152 = tpu.dynamic_rotate %151 by %c4_i32_57 dim 0 : vector<8x128xf32>, i32 -> vector<8x128xf32>
    %cst_58 = arith.constant 1.000000e+00 : f32
    %153 = vector.shape_cast %62 : vector<8x1xi1> to vector<8x1xi1>
    %154 = vector.broadcast %153 : vector<8x1xi1> to vector<8x128xi1>
    %155 = vector.broadcast %cst_58 : f32 to vector<8x128xf32>
    %156 = arith.select %154, %152, %155 : vector<8x128xi1>, vector<8x128xf32>
    %c4_i32_59 = arith.constant 4 : i32
    %157 = tpu.dynamic_rotate %150 by %c4_i32_59 dim 0 : vector<8x128xf32>, i32 -> vector<8x128xf32>
    %cst_60 = arith.constant 0.000000e+00 : f32
    %158 = vector.shape_cast %62 : vector<8x1xi1> to vector<8x1xi1>
    %159 = vector.broadcast %158 : vector<8x1xi1> to vector<8x128xi1>
    %160 = vector.broadcast %cst_60 : f32 to vector<8x128xf32>
    %161 = arith.select %159, %157, %160 : vector<8x128xi1>, vector<8x128xf32>
    %162 = arith.mulf %151, %161 : vector<8x128xf32>
    %163 = arith.addf %162, %150 : vector<8x128xf32>
    %164 = arith.mulf %151, %156 : vector<8x128xf32>
    %165 = vector.broadcast %64 : vector<1x128xf32> to vector<8x128xf32>
    %166 = arith.mulf %164, %165 : vector<8x128xf32>
    %167 = arith.addf %163, %166 : vector<8x128xf32>
    %168 = arith.index_cast %121 : i32 to index
    %c0_61 = arith.constant 0 : index
    %169 = vector.load %arg12[%168, %c0_61] : memref<64x128xf32, #tpu.memory_space<vmem>>, vector<8x128xf32>
    tpu.vector_store %arg12[%168, %c0_61], %167 {strides = array<i32>} : memref<64x128xf32, #tpu.memory_space<vmem>>, vector<8x128xf32>,
    %170 = vector.extract_strided_slice %167 {offsets = [7, 0], sizes = [1, 128], strides = [1, 1]} : vector<8x128xf32> to vector<1x128xf32>
    %c8_i32_62 = arith.constant 8 : i32
    %171 = arith.muli %c0_i32, %c8_i32_62 : i32
    %c32_i32 = arith.constant 32 : i32
    %172 = arith.addi %171, %c32_i32 : i32
    %173 = tpu.assume_multiple %172, 8 : i32
    %174 = arith.index_cast %173 : i32 to index
    %c0_63 = arith.constant 0 : index
    %175 = vector.load %arg10[%174, %c0_63] : memref<64x128xf32, #tpu.memory_space<vmem>>, vector<8x128xf32>
    %176 = arith.index_cast %173 : i32 to index
    %c0_64 = arith.constant 0 : index
    %177 = vector.load %arg11[%176, %c0_64] : memref<64x128xf32, #tpu.memory_space<vmem>>, vector<8x128xf32>
    %c1_i32_65 = arith.constant 1 : i32
    %178 = tpu.dynamic_rotate %175 by %c1_i32_65 dim 0 : vector<8x128xf32>, i32 -> vector<8x128xf32>
    %cst_66 = arith.constant 1.000000e+00 : f32
    %179 = vector.shape_cast %58 : vector<8x1xi1> to vector<8x1xi1>
    %180 = vector.broadcast %179 : vector<8x1xi1> to vector<8x128xi1>
    %181 = vector.broadcast %cst_66 : f32 to vector<8x128xf32>
    %182 = arith.select %180, %178, %181 : vector<8x128xi1>, vector<8x128xf32>
    %c1_i32_67 = arith.constant 1 : i32
    %183 = tpu.dynamic_rotate %177 by %c1_i32_67 dim 0 : vector<8x128xf32>, i32 -> vector<8x128xf32>
    %cst_68 = arith.constant 0.000000e+00 : f32
    %184 = vector.shape_cast %58 : vector<8x1xi1> to vector<8x1xi1>
    %185 = vector.broadcast %184 : vector<8x1xi1> to vector<8x128xi1>
    %186 = vector.broadcast %cst_68 : f32 to vector<8x128xf32>
    %187 = arith.select %185, %183, %186 : vector<8x128xi1>, vector<8x128xf32>
    %188 = arith.mulf %175, %187 : vector<8x128xf32>
    %189 = arith.addf %188, %177 : vector<8x128xf32>
    %190 = arith.mulf %175, %182 : vector<8x128xf32>
    %c2_i32_69 = arith.constant 2 : i32
    %191 = tpu.dynamic_rotate %190 by %c2_i32_69 dim 0 : vector<8x128xf32>, i32 -> vector<8x128xf32>
    %cst_70 = arith.constant 1.000000e+00 : f32
    %192 = vector.shape_cast %60 : vector<8x1xi1> to vector<8x1xi1>
    %193 = vector.broadcast %192 : vector<8x1xi1> to vector<8x128xi1>
    %194 = vector.broadcast %cst_70 : f32 to vector<8x128xf32>
    %195 = arith.select %193, %191, %194 : vector<8x128xi1>, vector<8x128xf32>
    %c2_i32_71 = arith.constant 2 : i32
    %196 = tpu.dynamic_rotate %189 by %c2_i32_71 dim 0 : vector<8x128xf32>, i32 -> vector<8x128xf32>
    %cst_72 = arith.constant 0.000000e+00 : f32
    %197 = vector.shape_cast %60 : vector<8x1xi1> to vector<8x1xi1>
    %198 = vector.broadcast %197 : vector<8x1xi1> to vector<8x128xi1>
    %199 = vector.broadcast %cst_72 : f32 to vector<8x128xf32>
    %200 = arith.select %198, %196, %199 : vector<8x128xi1>, vector<8x128xf32>
    %201 = arith.mulf %190, %200 : vector<8x128xf32>
    %202 = arith.addf %201, %189 : vector<8x128xf32>
    %203 = arith.mulf %190, %195 : vector<8x128xf32>
    %c4_i32_73 = arith.constant 4 : i32
    %204 = tpu.dynamic_rotate %203 by %c4_i32_73 dim 0 : vector<8x128xf32>, i32 -> vector<8x128xf32>
    %cst_74 = arith.constant 1.000000e+00 : f32
    %205 = vector.shape_cast %62 : vector<8x1xi1> to vector<8x1xi1>
    %206 = vector.broadcast %205 : vector<8x1xi1> to vector<8x128xi1>
    %207 = vector.broadcast %cst_74 : f32 to vector<8x128xf32>
    %208 = arith.select %206, %204, %207 : vector<8x128xi1>, vector<8x128xf32>
    %c4_i32_75 = arith.constant 4 : i32
    %209 = tpu.dynamic_rotate %202 by %c4_i32_75 dim 0 : vector<8x128xf32>, i32 -> vector<8x128xf32>
    %cst_76 = arith.constant 0.000000e+00 : f32
    %210 = vector.shape_cast %62 : vector<8x1xi1> to vector<8x1xi1>
    %211 = vector.broadcast %210 : vector<8x1xi1> to vector<8x128xi1>
    %212 = vector.broadcast %cst_76 : f32 to vector<8x128xf32>
    %213 = arith.select %211, %209, %212 : vector<8x128xi1>, vector<8x128xf32>
    %214 = arith.mulf %203, %213 : vector<8x128xf32>
    %215 = arith.addf %214, %202 : vector<8x128xf32>
    %216 = arith.mulf %203, %208 : vector<8x128xf32>
    %217 = vector.broadcast %65 : vector<1x128xf32> to vector<8x128xf32>
    %218 = arith.mulf %216, %217 : vector<8x128xf32>
    %219 = arith.addf %215, %218 : vector<8x128xf32>
    %220 = arith.index_cast %173 : i32 to index
    %c0_77 = arith.constant 0 : index
    %221 = vector.load %arg12[%220, %c0_77] : memref<64x128xf32, #tpu.memory_space<vmem>>, vector<8x128xf32>
    tpu.vector_store %arg12[%220, %c0_77], %219 {strides = array<i32>} : memref<64x128xf32, #tpu.memory_space<vmem>>, vector<8x128xf32>,
    %222 = vector.extract_strided_slice %219 {offsets = [7, 0], sizes = [1, 128], strides = [1, 1]} : vector<8x128xf32> to vector<1x128xf32>
    %c8_i32_78 = arith.constant 8 : i32
    %223 = arith.muli %c0_i32, %c8_i32_78 : i32
    %c48_i32 = arith.constant 48 : i32
    %224 = arith.addi %223, %c48_i32 : i32
    %225 = tpu.assume_multiple %224, 8 : i32
    %226 = arith.index_cast %225 : i32 to index
    %c0_79 = arith.constant 0 : index
    %227 = vector.load %arg10[%226, %c0_79] : memref<64x128xf32, #tpu.memory_space<vmem>>, vector<8x128xf32>
    %228 = arith.index_cast %225 : i32 to index
    %c0_80 = arith.constant 0 : index
    %229 = vector.load %arg11[%228, %c0_80] : memref<64x128xf32, #tpu.memory_space<vmem>>, vector<8x128xf32>
    %c1_i32_81 = arith.constant 1 : i32
    %230 = tpu.dynamic_rotate %227 by %c1_i32_81 dim 0 : vector<8x128xf32>, i32 -> vector<8x128xf32>
    %cst_82 = arith.constant 1.000000e+00 : f32
    %231 = vector.shape_cast %58 : vector<8x1xi1> to vector<8x1xi1>
    %232 = vector.broadcast %231 : vector<8x1xi1> to vector<8x128xi1>
    %233 = vector.broadcast %cst_82 : f32 to vector<8x128xf32>
    %234 = arith.select %232, %230, %233 : vector<8x128xi1>, vector<8x128xf32>
    %c1_i32_83 = arith.constant 1 : i32
    %235 = tpu.dynamic_rotate %229 by %c1_i32_83 dim 0 : vector<8x128xf32>, i32 -> vector<8x128xf32>
    %cst_84 = arith.constant 0.000000e+00 : f32
    %236 = vector.shape_cast %58 : vector<8x1xi1> to vector<8x1xi1>
    %237 = vector.broadcast %236 : vector<8x1xi1> to vector<8x128xi1>
    %238 = vector.broadcast %cst_84 : f32 to vector<8x128xf32>
    %239 = arith.select %237, %235, %238 : vector<8x128xi1>, vector<8x128xf32>
    %240 = arith.mulf %227, %239 : vector<8x128xf32>
    %241 = arith.addf %240, %229 : vector<8x128xf32>
    %242 = arith.mulf %227, %234 : vector<8x128xf32>
    %c2_i32_85 = arith.constant 2 : i32
    %243 = tpu.dynamic_rotate %242 by %c2_i32_85 dim 0 : vector<8x128xf32>, i32 -> vector<8x128xf32>
    %cst_86 = arith.constant 1.000000e+00 : f32
    %244 = vector.shape_cast %60 : vector<8x1xi1> to vector<8x1xi1>
    %245 = vector.broadcast %244 : vector<8x1xi1> to vector<8x128xi1>
    %246 = vector.broadcast %cst_86 : f32 to vector<8x128xf32>
    %247 = arith.select %245, %243, %246 : vector<8x128xi1>, vector<8x128xf32>
    %c2_i32_87 = arith.constant 2 : i32
    %248 = tpu.dynamic_rotate %241 by %c2_i32_87 dim 0 : vector<8x128xf32>, i32 -> vector<8x128xf32>
    %cst_88 = arith.constant 0.000000e+00 : f32
    %249 = vector.shape_cast %60 : vector<8x1xi1> to vector<8x1xi1>
    %250 = vector.broadcast %249 : vector<8x1xi1> to vector<8x128xi1>
    %251 = vector.broadcast %cst_88 : f32 to vector<8x128xf32>
    %252 = arith.select %250, %248, %251 : vector<8x128xi1>, vector<8x128xf32>
    %253 = arith.mulf %242, %252 : vector<8x128xf32>
    %254 = arith.addf %253, %241 : vector<8x128xf32>
    %255 = arith.mulf %242, %247 : vector<8x128xf32>
    %c4_i32_89 = arith.constant 4 : i32
    %256 = tpu.dynamic_rotate %255 by %c4_i32_89 dim 0 : vector<8x128xf32>, i32 -> vector<8x128xf32>
    %cst_90 = arith.constant 1.000000e+00 : f32
    %257 = vector.shape_cast %62 : vector<8x1xi1> to vector<8x1xi1>
    %258 = vector.broadcast %257 : vector<8x1xi1> to vector<8x128xi1>
    %259 = vector.broadcast %cst_90 : f32 to vector<8x128xf32>
    %260 = arith.select %258, %256, %259 : vector<8x128xi1>, vector<8x128xf32>
    %c4_i32_91 = arith.constant 4 : i32
    %261 = tpu.dynamic_rotate %254 by %c4_i32_91 dim 0 : vector<8x128xf32>, i32 -> vector<8x128xf32>
    %cst_92 = arith.constant 0.000000e+00 : f32
    %262 = vector.shape_cast %62 : vector<8x1xi1> to vector<8x1xi1>
    %263 = vector.broadcast %262 : vector<8x1xi1> to vector<8x128xi1>
    %264 = vector.broadcast %cst_92 : f32 to vector<8x128xf32>
    %265 = arith.select %263, %261, %264 : vector<8x128xi1>, vector<8x128xf32>
    %266 = arith.mulf %255, %265 : vector<8x128xf32>
    %267 = arith.addf %266, %254 : vector<8x128xf32>
    %268 = arith.mulf %255, %260 : vector<8x128xf32>
    %269 = vector.broadcast %66 : vector<1x128xf32> to vector<8x128xf32>
    %270 = arith.mulf %268, %269 : vector<8x128xf32>
    %271 = arith.addf %267, %270 : vector<8x128xf32>
    %272 = arith.index_cast %225 : i32 to index
    %c0_93 = arith.constant 0 : index
    %273 = vector.load %arg12[%272, %c0_93] : memref<64x128xf32, #tpu.memory_space<vmem>>, vector<8x128xf32>
    tpu.vector_store %arg12[%272, %c0_93], %271 {strides = array<i32>} : memref<64x128xf32, #tpu.memory_space<vmem>>, vector<8x128xf32>,
    %274 = vector.extract_strided_slice %271 {offsets = [7, 0], sizes = [1, 128], strides = [1, 1]} : vector<8x128xf32> to vector<1x128xf32>
    %c1_i32_94 = arith.constant 1 : i32
    %c8_i32_95 = arith.constant 8 : i32
    %275 = arith.muli %c1_i32_94, %c8_i32_95 : i32
    %c0_i32_96 = arith.constant 0 : i32
    %276 = arith.addi %275, %c0_i32_96 : i32
    %277 = tpu.assume_multiple %276, 8 : i32
    %278 = arith.index_cast %277 : i32 to index
    %c0_97 = arith.constant 0 : index
    %279 = vector.load %arg10[%278, %c0_97] : memref<64x128xf32, #tpu.memory_space<vmem>>, vector<8x128xf32>
    %280 = arith.index_cast %277 : i32 to index
    %c0_98 = arith.constant 0 : index
    %281 = vector.load %arg11[%280, %c0_98] : memref<64x128xf32, #tpu.memory_space<vmem>>, vector<8x128xf32>
    %c1_i32_99 = arith.constant 1 : i32
    %282 = tpu.dynamic_rotate %279 by %c1_i32_99 dim 0 : vector<8x128xf32>, i32 -> vector<8x128xf32>
    %cst_100 = arith.constant 1.000000e+00 : f32
    %283 = vector.shape_cast %58 : vector<8x1xi1> to vector<8x1xi1>
    %284 = vector.broadcast %283 : vector<8x1xi1> to vector<8x128xi1>
    %285 = vector.broadcast %cst_100 : f32 to vector<8x128xf32>
    %286 = arith.select %284, %282, %285 : vector<8x128xi1>, vector<8x128xf32>
    %c1_i32_101 = arith.constant 1 : i32
    %287 = tpu.dynamic_rotate %281 by %c1_i32_101 dim 0 : vector<8x128xf32>, i32 -> vector<8x128xf32>
    %cst_102 = arith.constant 0.000000e+00 : f32
    %288 = vector.shape_cast %58 : vector<8x1xi1> to vector<8x1xi1>
    %289 = vector.broadcast %288 : vector<8x1xi1> to vector<8x128xi1>
    %290 = vector.broadcast %cst_102 : f32 to vector<8x128xf32>
    %291 = arith.select %289, %287, %290 : vector<8x128xi1>, vector<8x128xf32>
    %292 = arith.mulf %279, %291 : vector<8x128xf32>
    %293 = arith.addf %292, %281 : vector<8x128xf32>
    %294 = arith.mulf %279, %286 : vector<8x128xf32>
    %c2_i32_103 = arith.constant 2 : i32
    %295 = tpu.dynamic_rotate %294 by %c2_i32_103 dim 0 : vector<8x128xf32>, i32 -> vector<8x128xf32>
    %cst_104 = arith.constant 1.000000e+00 : f32
    %296 = vector.shape_cast %60 : vector<8x1xi1> to vector<8x1xi1>
    %297 = vector.broadcast %296 : vector<8x1xi1> to vector<8x128xi1>
    %298 = vector.broadcast %cst_104 : f32 to vector<8x128xf32>
    %299 = arith.select %297, %295, %298 : vector<8x128xi1>, vector<8x128xf32>
    %c2_i32_105 = arith.constant 2 : i32
    %300 = tpu.dynamic_rotate %293 by %c2_i32_105 dim 0 : vector<8x128xf32>, i32 -> vector<8x128xf32>
    %cst_106 = arith.constant 0.000000e+00 : f32
    %301 = vector.shape_cast %60 : vector<8x1xi1> to vector<8x1xi1>
    %302 = vector.broadcast %301 : vector<8x1xi1> to vector<8x128xi1>
    %303 = vector.broadcast %cst_106 : f32 to vector<8x128xf32>
    %304 = arith.select %302, %300, %303 : vector<8x128xi1>, vector<8x128xf32>
    %305 = arith.mulf %294, %304 : vector<8x128xf32>
    %306 = arith.addf %305, %293 : vector<8x128xf32>
    %307 = arith.mulf %294, %299 : vector<8x128xf32>
    %c4_i32_107 = arith.constant 4 : i32
    %308 = tpu.dynamic_rotate %307 by %c4_i32_107 dim 0 : vector<8x128xf32>, i32 -> vector<8x128xf32>
    %cst_108 = arith.constant 1.000000e+00 : f32
    %309 = vector.shape_cast %62 : vector<8x1xi1> to vector<8x1xi1>
    %310 = vector.broadcast %309 : vector<8x1xi1> to vector<8x128xi1>
    %311 = vector.broadcast %cst_108 : f32 to vector<8x128xf32>
    %312 = arith.select %310, %308, %311 : vector<8x128xi1>, vector<8x128xf32>
    %c4_i32_109 = arith.constant 4 : i32
    %313 = tpu.dynamic_rotate %306 by %c4_i32_109 dim 0 : vector<8x128xf32>, i32 -> vector<8x128xf32>
    %cst_110 = arith.constant 0.000000e+00 : f32
    %314 = vector.shape_cast %62 : vector<8x1xi1> to vector<8x1xi1>
    %315 = vector.broadcast %314 : vector<8x1xi1> to vector<8x128xi1>
    %316 = vector.broadcast %cst_110 : f32 to vector<8x128xf32>
    %317 = arith.select %315, %313, %316 : vector<8x128xi1>, vector<8x128xf32>
    %318 = arith.mulf %307, %317 : vector<8x128xf32>
    %319 = arith.addf %318, %306 : vector<8x128xf32>
    %320 = arith.mulf %307, %312 : vector<8x128xf32>
    %321 = vector.broadcast %118 : vector<1x128xf32> to vector<8x128xf32>
    %322 = arith.mulf %320, %321 : vector<8x128xf32>
    %323 = arith.addf %319, %322 : vector<8x128xf32>
    %324 = arith.index_cast %277 : i32 to index
    %c0_111 = arith.constant 0 : index
    %325 = vector.load %arg12[%324, %c0_111] : memref<64x128xf32, #tpu.memory_space<vmem>>, vector<8x128xf32>
    tpu.vector_store %arg12[%324, %c0_111], %323 {strides = array<i32>} : memref<64x128xf32, #tpu.memory_space<vmem>>, vector<8x128xf32>,
    %326 = vector.extract_strided_slice %323 {offsets = [7, 0], sizes = [1, 128], strides = [1, 1]} : vector<8x128xf32> to vector<1x128xf32>
    %c8_i32_112 = arith.constant 8 : i32
    %327 = arith.muli %c1_i32_94, %c8_i32_112 : i32
    %c16_i32_113 = arith.constant 16 : i32
    %328 = arith.addi %327, %c16_i32_113 : i32
    %329 = tpu.assume_multiple %328, 8 : i32
    %330 = arith.index_cast %329 : i32 to index
    %c0_114 = arith.constant 0 : index
    %331 = vector.load %arg10[%330, %c0_114] : memref<64x128xf32, #tpu.memory_space<vmem>>, vector<8x128xf32>
    %332 = arith.index_cast %329 : i32 to index
    %c0_115 = arith.constant 0 : index
    %333 = vector.load %arg11[%332, %c0_115] : memref<64x128xf32, #tpu.memory_space<vmem>>, vector<8x128xf32>
    %c1_i32_116 = arith.constant 1 : i32
    %334 = tpu.dynamic_rotate %331 by %c1_i32_116 dim 0 : vector<8x128xf32>, i32 -> vector<8x128xf32>
    %cst_117 = arith.constant 1.000000e+00 : f32
    %335 = vector.shape_cast %58 : vector<8x1xi1> to vector<8x1xi1>
    %336 = vector.broadcast %335 : vector<8x1xi1> to vector<8x128xi1>
    %337 = vector.broadcast %cst_117 : f32 to vector<8x128xf32>
    %338 = arith.select %336, %334, %337 : vector<8x128xi1>, vector<8x128xf32>
    %c1_i32_118 = arith.constant 1 : i32
    %339 = tpu.dynamic_rotate %333 by %c1_i32_118 dim 0 : vector<8x128xf32>, i32 -> vector<8x128xf32>
    %cst_119 = arith.constant 0.000000e+00 : f32
    %340 = vector.shape_cast %58 : vector<8x1xi1> to vector<8x1xi1>
    %341 = vector.broadcast %340 : vector<8x1xi1> to vector<8x128xi1>
    %342 = vector.broadcast %cst_119 : f32 to vector<8x128xf32>
    %343 = arith.select %341, %339, %342 : vector<8x128xi1>, vector<8x128xf32>
    %344 = arith.mulf %331, %343 : vector<8x128xf32>
    %345 = arith.addf %344, %333 : vector<8x128xf32>
    %346 = arith.mulf %331, %338 : vector<8x128xf32>
    %c2_i32_120 = arith.constant 2 : i32
    %347 = tpu.dynamic_rotate %346 by %c2_i32_120 dim 0 : vector<8x128xf32>, i32 -> vector<8x128xf32>
    %cst_121 = arith.constant 1.000000e+00 : f32
    %348 = vector.shape_cast %60 : vector<8x1xi1> to vector<8x1xi1>
    %349 = vector.broadcast %348 : vector<8x1xi1> to vector<8x128xi1>
    %350 = vector.broadcast %cst_121 : f32 to vector<8x128xf32>
    %351 = arith.select %349, %347, %350 : vector<8x128xi1>, vector<8x128xf32>
    %c2_i32_122 = arith.constant 2 : i32
    %352 = tpu.dynamic_rotate %345 by %c2_i32_122 dim 0 : vector<8x128xf32>, i32 -> vector<8x128xf32>
    %cst_123 = arith.constant 0.000000e+00 : f32
    %353 = vector.shape_cast %60 : vector<8x1xi1> to vector<8x1xi1>
    %354 = vector.broadcast %353 : vector<8x1xi1> to vector<8x128xi1>
    %355 = vector.broadcast %cst_123 : f32 to vector<8x128xf32>
    %356 = arith.select %354, %352, %355 : vector<8x128xi1>, vector<8x128xf32>
    %357 = arith.mulf %346, %356 : vector<8x128xf32>
    %358 = arith.addf %357, %345 : vector<8x128xf32>
    %359 = arith.mulf %346, %351 : vector<8x128xf32>
    %c4_i32_124 = arith.constant 4 : i32
    %360 = tpu.dynamic_rotate %359 by %c4_i32_124 dim 0 : vector<8x128xf32>, i32 -> vector<8x128xf32>
    %cst_125 = arith.constant 1.000000e+00 : f32
    %361 = vector.shape_cast %62 : vector<8x1xi1> to vector<8x1xi1>
    %362 = vector.broadcast %361 : vector<8x1xi1> to vector<8x128xi1>
    %363 = vector.broadcast %cst_125 : f32 to vector<8x128xf32>
    %364 = arith.select %362, %360, %363 : vector<8x128xi1>, vector<8x128xf32>
    %c4_i32_126 = arith.constant 4 : i32
    %365 = tpu.dynamic_rotate %358 by %c4_i32_126 dim 0 : vector<8x128xf32>, i32 -> vector<8x128xf32>
    %cst_127 = arith.constant 0.000000e+00 : f32
    %366 = vector.shape_cast %62 : vector<8x1xi1> to vector<8x1xi1>
    %367 = vector.broadcast %366 : vector<8x1xi1> to vector<8x128xi1>
    %368 = vector.broadcast %cst_127 : f32 to vector<8x128xf32>
    %369 = arith.select %367, %365, %368 : vector<8x128xi1>, vector<8x128xf32>
    %370 = arith.mulf %359, %369 : vector<8x128xf32>
    %371 = arith.addf %370, %358 : vector<8x128xf32>
    %372 = arith.mulf %359, %364 : vector<8x128xf32>
    %373 = vector.broadcast %170 : vector<1x128xf32> to vector<8x128xf32>
    %374 = arith.mulf %372, %373 : vector<8x128xf32>
    %375 = arith.addf %371, %374 : vector<8x128xf32>
    %376 = arith.index_cast %329 : i32 to index
    %c0_128 = arith.constant 0 : index
    %377 = vector.load %arg12[%376, %c0_128] : memref<64x128xf32, #tpu.memory_space<vmem>>, vector<8x128xf32>
    tpu.vector_store %arg12[%376, %c0_128], %375 {strides = array<i32>} : memref<64x128xf32, #tpu.memory_space<vmem>>, vector<8x128xf32>,
    %378 = vector.extract_strided_slice %375 {offsets = [7, 0], sizes = [1, 128], strides = [1, 1]} : vector<8x128xf32> to vector<1x128xf32>
    %c8_i32_129 = arith.constant 8 : i32
    %379 = arith.muli %c1_i32_94, %c8_i32_129 : i32
    %c32_i32_130 = arith.constant 32 : i32
    %380 = arith.addi %379, %c32_i32_130 : i32
    %381 = tpu.assume_multiple %380, 8 : i32
    %382 = arith.index_cast %381 : i32 to index
    %c0_131 = arith.constant 0 : index
    %383 = vector.load %arg10[%382, %c0_131] : memref<64x128xf32, #tpu.memory_space<vmem>>, vector<8x128xf32>
    %384 = arith.index_cast %381 : i32 to index
    %c0_132 = arith.constant 0 : index
    %385 = vector.load %arg11[%384, %c0_132] : memref<64x128xf32, #tpu.memory_space<vmem>>, vector<8x128xf32>
    %c1_i32_133 = arith.constant 1 : i32
    %386 = tpu.dynamic_rotate %383 by %c1_i32_133 dim 0 : vector<8x128xf32>, i32 -> vector<8x128xf32>
    %cst_134 = arith.constant 1.000000e+00 : f32
    %387 = vector.shape_cast %58 : vector<8x1xi1> to vector<8x1xi1>
    %388 = vector.broadcast %387 : vector<8x1xi1> to vector<8x128xi1>
    %389 = vector.broadcast %cst_134 : f32 to vector<8x128xf32>
    %390 = arith.select %388, %386, %389 : vector<8x128xi1>, vector<8x128xf32>
    %c1_i32_135 = arith.constant 1 : i32
    %391 = tpu.dynamic_rotate %385 by %c1_i32_135 dim 0 : vector<8x128xf32>, i32 -> vector<8x128xf32>
    %cst_136 = arith.constant 0.000000e+00 : f32
    %392 = vector.shape_cast %58 : vector<8x1xi1> to vector<8x1xi1>
    %393 = vector.broadcast %392 : vector<8x1xi1> to vector<8x128xi1>
    %394 = vector.broadcast %cst_136 : f32 to vector<8x128xf32>
    %395 = arith.select %393, %391, %394 : vector<8x128xi1>, vector<8x128xf32>
    %396 = arith.mulf %383, %395 : vector<8x128xf32>
    %397 = arith.addf %396, %385 : vector<8x128xf32>
    %398 = arith.mulf %383, %390 : vector<8x128xf32>
    %c2_i32_137 = arith.constant 2 : i32
    %399 = tpu.dynamic_rotate %398 by %c2_i32_137 dim 0 : vector<8x128xf32>, i32 -> vector<8x128xf32>
    %cst_138 = arith.constant 1.000000e+00 : f32
    %400 = vector.shape_cast %60 : vector<8x1xi1> to vector<8x1xi1>
    %401 = vector.broadcast %400 : vector<8x1xi1> to vector<8x128xi1>
    %402 = vector.broadcast %cst_138 : f32 to vector<8x128xf32>
    %403 = arith.select %401, %399, %402 : vector<8x128xi1>, vector<8x128xf32>
    %c2_i32_139 = arith.constant 2 : i32
    %404 = tpu.dynamic_rotate %397 by %c2_i32_139 dim 0 : vector<8x128xf32>, i32 -> vector<8x128xf32>
    %cst_140 = arith.constant 0.000000e+00 : f32
    %405 = vector.shape_cast %60 : vector<8x1xi1> to vector<8x1xi1>
    %406 = vector.broadcast %405 : vector<8x1xi1> to vector<8x128xi1>
    %407 = vector.broadcast %cst_140 : f32 to vector<8x128xf32>
    %408 = arith.select %406, %404, %407 : vector<8x128xi1>, vector<8x128xf32>
    %409 = arith.mulf %398, %408 : vector<8x128xf32>
    %410 = arith.addf %409, %397 : vector<8x128xf32>
    %411 = arith.mulf %398, %403 : vector<8x128xf32>
    %c4_i32_141 = arith.constant 4 : i32
    %412 = tpu.dynamic_rotate %411 by %c4_i32_141 dim 0 : vector<8x128xf32>, i32 -> vector<8x128xf32>
    %cst_142 = arith.constant 1.000000e+00 : f32
    %413 = vector.shape_cast %62 : vector<8x1xi1> to vector<8x1xi1>
    %414 = vector.broadcast %413 : vector<8x1xi1> to vector<8x128xi1>
    %415 = vector.broadcast %cst_142 : f32 to vector<8x128xf32>
    %416 = arith.select %414, %412, %415 : vector<8x128xi1>, vector<8x128xf32>
    %c4_i32_143 = arith.constant 4 : i32
    %417 = tpu.dynamic_rotate %410 by %c4_i32_143 dim 0 : vector<8x128xf32>, i32 -> vector<8x128xf32>
    %cst_144 = arith.constant 0.000000e+00 : f32
    %418 = vector.shape_cast %62 : vector<8x1xi1> to vector<8x1xi1>
    %419 = vector.broadcast %418 : vector<8x1xi1> to vector<8x128xi1>
    %420 = vector.broadcast %cst_144 : f32 to vector<8x128xf32>
    %421 = arith.select %419, %417, %420 : vector<8x128xi1>, vector<8x128xf32>
    %422 = arith.mulf %411, %421 : vector<8x128xf32>
    %423 = arith.addf %422, %410 : vector<8x128xf32>
    %424 = arith.mulf %411, %416 : vector<8x128xf32>
    %425 = vector.broadcast %222 : vector<1x128xf32> to vector<8x128xf32>
    %426 = arith.mulf %424, %425 : vector<8x128xf32>
    %427 = arith.addf %423, %426 : vector<8x128xf32>
    %428 = arith.index_cast %381 : i32 to index
    %c0_145 = arith.constant 0 : index
    %429 = vector.load %arg12[%428, %c0_145] : memref<64x128xf32, #tpu.memory_space<vmem>>, vector<8x128xf32>
    tpu.vector_store %arg12[%428, %c0_145], %427 {strides = array<i32>} : memref<64x128xf32, #tpu.memory_space<vmem>>, vector<8x128xf32>,
    %430 = vector.extract_strided_slice %427 {offsets = [7, 0], sizes = [1, 128], strides = [1, 1]} : vector<8x128xf32> to vector<1x128xf32>
    %c8_i32_146 = arith.constant 8 : i32
    %431 = arith.muli %c1_i32_94, %c8_i32_146 : i32
    %c48_i32_147 = arith.constant 48 : i32
    %432 = arith.addi %431, %c48_i32_147 : i32
    %433 = tpu.assume_multiple %432, 8 : i32
    %434 = arith.index_cast %433 : i32 to index
    %c0_148 = arith.constant 0 : index
    %435 = vector.load %arg10[%434, %c0_148] : memref<64x128xf32, #tpu.memory_space<vmem>>, vector<8x128xf32>
    %436 = arith.index_cast %433 : i32 to index
    %c0_149 = arith.constant 0 : index
    %437 = vector.load %arg11[%436, %c0_149] : memref<64x128xf32, #tpu.memory_space<vmem>>, vector<8x128xf32>
    %c1_i32_150 = arith.constant 1 : i32
    %438 = tpu.dynamic_rotate %435 by %c1_i32_150 dim 0 : vector<8x128xf32>, i32 -> vector<8x128xf32>
    %cst_151 = arith.constant 1.000000e+00 : f32
    %439 = vector.shape_cast %58 : vector<8x1xi1> to vector<8x1xi1>
    %440 = vector.broadcast %439 : vector<8x1xi1> to vector<8x128xi1>
    %441 = vector.broadcast %cst_151 : f32 to vector<8x128xf32>
    %442 = arith.select %440, %438, %441 : vector<8x128xi1>, vector<8x128xf32>
    %c1_i32_152 = arith.constant 1 : i32
    %443 = tpu.dynamic_rotate %437 by %c1_i32_152 dim 0 : vector<8x128xf32>, i32 -> vector<8x128xf32>
    %cst_153 = arith.constant 0.000000e+00 : f32
    %444 = vector.shape_cast %58 : vector<8x1xi1> to vector<8x1xi1>
    %445 = vector.broadcast %444 : vector<8x1xi1> to vector<8x128xi1>
    %446 = vector.broadcast %cst_153 : f32 to vector<8x128xf32>
    %447 = arith.select %445, %443, %446 : vector<8x128xi1>, vector<8x128xf32>
    %448 = arith.mulf %435, %447 : vector<8x128xf32>
    %449 = arith.addf %448, %437 : vector<8x128xf32>
    %450 = arith.mulf %435, %442 : vector<8x128xf32>
    %c2_i32_154 = arith.constant 2 : i32
    %451 = tpu.dynamic_rotate %450 by %c2_i32_154 dim 0 : vector<8x128xf32>, i32 -> vector<8x128xf32>
    %cst_155 = arith.constant 1.000000e+00 : f32
    %452 = vector.shape_cast %60 : vector<8x1xi1> to vector<8x1xi1>
    %453 = vector.broadcast %452 : vector<8x1xi1> to vector<8x128xi1>
    %454 = vector.broadcast %cst_155 : f32 to vector<8x128xf32>
    %455 = arith.select %453, %451, %454 : vector<8x128xi1>, vector<8x128xf32>
    %c2_i32_156 = arith.constant 2 : i32
    %456 = tpu.dynamic_rotate %449 by %c2_i32_156 dim 0 : vector<8x128xf32>, i32 -> vector<8x128xf32>
    %cst_157 = arith.constant 0.000000e+00 : f32
    %457 = vector.shape_cast %60 : vector<8x1xi1> to vector<8x1xi1>
    %458 = vector.broadcast %457 : vector<8x1xi1> to vector<8x128xi1>
    %459 = vector.broadcast %cst_157 : f32 to vector<8x128xf32>
    %460 = arith.select %458, %456, %459 : vector<8x128xi1>, vector<8x128xf32>
    %461 = arith.mulf %450, %460 : vector<8x128xf32>
    %462 = arith.addf %461, %449 : vector<8x128xf32>
    %463 = arith.mulf %450, %455 : vector<8x128xf32>
    %c4_i32_158 = arith.constant 4 : i32
    %464 = tpu.dynamic_rotate %463 by %c4_i32_158 dim 0 : vector<8x128xf32>, i32 -> vector<8x128xf32>
    %cst_159 = arith.constant 1.000000e+00 : f32
    %465 = vector.shape_cast %62 : vector<8x1xi1> to vector<8x1xi1>
    %466 = vector.broadcast %465 : vector<8x1xi1> to vector<8x128xi1>
    %467 = vector.broadcast %cst_159 : f32 to vector<8x128xf32>
    %468 = arith.select %466, %464, %467 : vector<8x128xi1>, vector<8x128xf32>
    %c4_i32_160 = arith.constant 4 : i32
    %469 = tpu.dynamic_rotate %462 by %c4_i32_160 dim 0 : vector<8x128xf32>, i32 -> vector<8x128xf32>
    %cst_161 = arith.constant 0.000000e+00 : f32
    %470 = vector.shape_cast %62 : vector<8x1xi1> to vector<8x1xi1>
    %471 = vector.broadcast %470 : vector<8x1xi1> to vector<8x128xi1>
    %472 = vector.broadcast %cst_161 : f32 to vector<8x128xf32>
    %473 = arith.select %471, %469, %472 : vector<8x128xi1>, vector<8x128xf32>
    %474 = arith.mulf %463, %473 : vector<8x128xf32>
    %475 = arith.addf %474, %462 : vector<8x128xf32>
    %476 = arith.mulf %463, %468 : vector<8x128xf32>
    %477 = vector.broadcast %274 : vector<1x128xf32> to vector<8x128xf32>
    %478 = arith.mulf %476, %477 : vector<8x128xf32>
    %479 = arith.addf %475, %478 : vector<8x128xf32>
    %480 = arith.index_cast %433 : i32 to index
    %c0_162 = arith.constant 0 : index
    %481 = vector.load %arg12[%480, %c0_162] : memref<64x128xf32, #tpu.memory_space<vmem>>, vector<8x128xf32>
    tpu.vector_store %arg12[%480, %c0_162], %479 {strides = array<i32>} : memref<64x128xf32, #tpu.memory_space<vmem>>, vector<8x128xf32>,
    %482 = vector.extract_strided_slice %479 {offsets = [7, 0], sizes = [1, 128], strides = [1, 1]} : vector<8x128xf32> to vector<1x128xf32>
    %c2_i32_163 = arith.constant 2 : i32
    %c0_164 = arith.constant 0 : index
    %c0_165 = arith.constant 0 : index
    %483 = vector.load %arg12[%c0_164, %c0_165] : memref<64x128xf32, #tpu.memory_space<vmem>>, vector<64x128xf32>
    %484 = arith.mulf %20, %483 : vector<64x128xf32>
    %485 = arith.truncf %484 : vector<64x128xf32> to vector<64x128xbf16>
    %c0_166 = arith.constant 0 : index
    %c0_167 = arith.constant 0 : index
    %486 = vector.load %arg7[%c0_166, %c0_167] : memref<128x32xbf16, #tpu.memory_space<vmem>>, vector<128x32xbf16>
    %cst_168 = arith.constant dense<0.000000e+00> : vector<64x32xf32>
    %487 = tpu.matmul %485, %486, %cst_168 {dimension_numbers = #tpu.dot_dimension_numbers<[1], [0], [0], [1], [0, 0, 1, 1], [], []>} : vector<64x128xbf16>, vector<128x32xbf16>, vector<64x32xf32> -> vector<64x32xf32>
    %c0_169 = arith.constant 0 : index
    %c0_170 = arith.constant 0 : index
    %488 = vector.load %arg8[%c0_169, %c0_170] : memref<1x32xf32, #tpu.memory_space<vmem>>, vector<1x32xf32>
    %489 = vector.broadcast %488 : vector<1x32xf32> to vector<64x32xf32>
    %490 = arith.addf %487, %489 : vector<64x32xf32>
    %491 = vector.shape_cast %490 : vector<64x32xf32> to vector<4x16x32xf32>
    %c0_171 = arith.constant 0 : index
    %c0_172 = arith.constant 0 : index
    %c0_173 = arith.constant 0 : index
    %492 = vector.load %arg9[%c0_171, %c0_172, %c0_173] : memref<4x16x32xf32, #tpu.memory_space<vmem>>, vector<4x16x32xf32>
    tpu.vector_store %arg9[%c0_171, %c0_172, %c0_173], %491 {strides = array<i32>} : memref<4x16x32xf32, #tpu.memory_space<vmem>>, vector<4x16x32xf32>,
    return
  }
  func.func @transform_0(%arg0: i32) -> (i32, i32, i32) {
    %c0_i32 = arith.constant 0 : i32
    %c0_i32_0 = arith.constant 0 : i32
    %c0_i32_1 = arith.constant 0 : i32
    return %arg0, %c0_i32, %c0_i32_0 : i32, i32, i32
  }
  func.func @transform_1(%arg0: i32) -> (i32, i32) {
    %c0_i32 = arith.constant 0 : i32
    %c0_i32_0 = arith.constant 0 : i32
    %c0_i32_1 = arith.constant 0 : i32
    return %c0_i32, %c0_i32_0 : i32, i32
  }
  func.func @transform_2(%arg0: i32) -> (i32, i32) {
    %c0_i32 = arith.constant 0 : i32
    %c0_i32_0 = arith.constant 0 : i32
    %c0_i32_1 = arith.constant 0 : i32
    return %c0_i32, %c0_i32_0 : i32, i32
  }
  func.func @transform_3(%arg0: i32) -> (i32, i32) {
    %c0_i32 = arith.constant 0 : i32
    %c0_i32_0 = arith.constant 0 : i32
    %c0_i32_1 = arith.constant 0 : i32
    return %c0_i32, %c0_i32_0 : i32, i32
  }
  func.func @transform_4(%arg0: i32) -> (i32, i32) {
    %c0_i32 = arith.constant 0 : i32
    %c0_i32_0 = arith.constant 0 : i32
    %c0_i32_1 = arith.constant 0 : i32
    return %c0_i32, %c0_i32_0 : i32, i32
  }
  func.func @transform_5(%arg0: i32) -> (i32, i32) {
    %c0_i32 = arith.constant 0 : i32
    %c0_i32_0 = arith.constant 0 : i32
    %c0_i32_1 = arith.constant 0 : i32
    return %c0_i32, %c0_i32_0 : i32, i32
  }
  func.func @transform_6(%arg0: i32) -> (i32, i32) {
    %c0_i32 = arith.constant 0 : i32
    %c0_i32_0 = arith.constant 0 : i32
    %c0_i32_1 = arith.constant 0 : i32
    return %c0_i32, %c0_i32_0 : i32, i32
  }
  func.func @transform_7(%arg0: i32) -> (i32, i32) {
    %c0_i32 = arith.constant 0 : i32
    %c0_i32_0 = arith.constant 0 : i32
    %c0_i32_1 = arith.constant 0 : i32
    return %c0_i32, %c0_i32_0 : i32, i32
  }
  func.func @transform_8(%arg0: i32) -> (i32, i32, i32) {
    %c0_i32 = arith.constant 0 : i32
    %c0_i32_0 = arith.constant 0 : i32
    %c0_i32_1 = arith.constant 0 : i32
    return %arg0, %c0_i32, %c0_i32_0 : i32, i32, i32
  }
}

</mosaic_0001>

<llo_original>
// kernel: recurrent_block_forward.1
$region0: #{recurrent_block_forward.1}
  #allocation0 [shape = 'u32[]', space=smem, size = 0x4, offset = 0x4, fixed_abs, tag = 'smem constant byte address 0x4 - core index']
  #allocation1 [shape = 'u32[144,128]{1,0:T(1,128)}', space=vmem, size = 0x12000, scoped, tag = 'internal scratch']
  #allocation2 [shape = 'f32[64,128]{1,0:T(8,128)}', space=vmem, size = 0x8000, scoped, tag = 'scratch operand']
  #allocation3 [shape = 'f32[64,128]{1,0:T(8,128)}', space=vmem, size = 0x8000, scoped, tag = 'scratch operand']
  #allocation4 [shape = 'f32[64,128]{1,0:T(8,128)}', space=vmem, size = 0x8000, scoped, tag = 'scratch operand']
  %s0 = inlined_call_operand.vmem [shape: bf16[4,16,32], index: 0, kind: input, shape index: {}]
  %s1 = inlined_call_operand.vmem [shape: bf16[32,256], index: 1, kind: input, shape index: {}]
  %s2 = inlined_call_operand.vmem [shape: f32[1,256], index: 2, kind: input, shape index: {}]
  %s3 = inlined_call_operand.vmem [shape: bf16[128,256], index: 3, kind: input, shape index: {}]
  %s4 = inlined_call_operand.vmem [shape: f32[1,256], index: 4, kind: input, shape index: {}]
  %s5 = inlined_call_operand.vmem [shape: f32[1,128], index: 5, kind: input, shape index: {}]
  %s6 = inlined_call_operand.vmem [shape: bf16[128,32], index: 6, kind: input, shape index: {}]
  %s7 = inlined_call_operand.vmem [shape: f32[1,32], index: 7, kind: input, shape index: {}]
  %s8 = inlined_call_operand.hbm [shape: f32[4,16,32], index: 8, kind: output, shape index: {}]
  %s9 = sld [smem:[#allocation0]]
  $region42: #{recurrent_block_forward.1} parent=0
    _
  %s11 = ssub.s32 1, %s9
  %s12 = scalar_select 0, %s11, %s9
  $region1: #{recurrent_block_forward.1} parent=0
    #allocation5 [shape = 'u8[32768]{0}', space=vmem, size = 0x8000, scoped, tag = 'output window, operand 0, single buffered']
    #allocation6 [shape = 's32[1]{0}', space=sflag, size = 0x4, scoped, tag = 'scoped memory for recurrent_block_forward.1']
    %13 = vsyncpa [#allocation6], 0
    // Predicated region
    $region2: #{recurrent_block_forward.1} parent=1 // pred_check
      _
    $region3: #{recurrent_block_forward.1} parent=1 // pred_check_branch
      %15 = sbr.rel (0) target = $region5
    $region4: #{recurrent_block_forward.1} parent=1 // pred_region
      _
    $region5: #{recurrent_block_forward.1} parent=1 // pred_fallthru
      _
    // Predicated region
    $region6: #{recurrent_block_forward.1} parent=1 // pred_check
      _
    $region7: #{recurrent_block_forward.1} parent=1 // pred_check_branch
      %17 = sbr.rel (0) target = $region9
    $region8: #{recurrent_block_forward.1} parent=1 // pred_region
      _
    $region9: #{recurrent_block_forward.1} parent=1 // pred_fallthru
      _
    // Predicated region
    $region10: #{recurrent_block_forward.1} parent=1 // pred_check
      _
    $region11: #{recurrent_block_forward.1} parent=1 // pred_check_branch
      %19 = sbr.rel (0) target = $region13
    $region12: #{recurrent_block_forward.1} parent=1 // pred_region
      _
    $region13: #{recurrent_block_forward.1} parent=1 // pred_fallthru
      _
    // Predicated region
    $region14: #{recurrent_block_forward.1} parent=1 // pred_check
      _
    $region15: #{recurrent_block_forward.1} parent=1 // pred_check_branch
      %21 = sbr.rel (0) target = $region17
    $region16: #{recurrent_block_forward.1} parent=1 // pred_region
      _
    $region17: #{recurrent_block_forward.1} parent=1 // pred_fallthru
      _
    // Predicated region
    $region18: #{recurrent_block_forward.1} parent=1 // pred_check
      _
    $region19: #{recurrent_block_forward.1} parent=1 // pred_check_branch
      %23 = sbr.rel (0) target = $region21
    $region20: #{recurrent_block_forward.1} parent=1 // pred_region
      _
    $region21: #{recurrent_block_forward.1} parent=1 // pred_fallthru
      _
    // Predicated region
    $region22: #{recurrent_block_forward.1} parent=1 // pred_check
      _
    $region23: #{recurrent_block_forward.1} parent=1 // pred_check_branch
      %25 = sbr.rel (0) target = $region25
    $region24: #{recurrent_block_forward.1} parent=1 // pred_region
      _
    $region25: #{recurrent_block_forward.1} parent=1 // pred_fallthru
      _
    // Predicated region
    $region26: #{recurrent_block_forward.1} parent=1 // pred_check
      _
    $region27: #{recurrent_block_forward.1} parent=1 // pred_check_branch
      %27 = sbr.rel (0) target = $region29
    $region28: #{recurrent_block_forward.1} parent=1 // pred_region
      _
    $region29: #{recurrent_block_forward.1} parent=1 // pred_fallthru
      _
    // Predicated region
    $region30: #{recurrent_block_forward.1} parent=1 // pred_check
      _
    $region31: #{recurrent_block_forward.1} parent=1 // pred_check_branch
      %29 = sbr.rel (0) target = $region33
    $region32: #{recurrent_block_forward.1} parent=1 // pred_region
      _
    $region33: #{recurrent_block_forward.1} parent=1 // pred_fallthru
      _
    %v31 = vld [vmem:[%s0] sm:$0xf]
    %v32 = vld [vmem:[%s0 + $0x4] sm:$0xf]
    %v33 = vld [vmem:[%s0 + $0x8] sm:$0xf]
    %v34 = vld [vmem:[%s0 + $0xc] sm:$0xf]
    %v35 = vld [vmem:[%s0 + $0x10] sm:$0xf]
    %v36 = vld [vmem:[%s0 + $0x14] sm:$0xf]
    %v37 = vld [vmem:[%s0 + $0x18] sm:$0xf]
    %v38 = vld [vmem:[%s0 + $0x1c] sm:$0xf]
    %v39 = vld [vmem:[%s1] sm:$0xff]
    %v40 = vld [vmem:[%s1 + $0x8] sm:$0xff]
    %v41 = vld [vmem:[%s1 + $0x10] sm:$0xff]
    %v42 = vld [vmem:[%s1 + $0x18] sm:$0xff]
    %v43 = vld [vmem:[%s2] sm:$0x3]
    %v45 = vlaneseq
    %v46 = vshrl.u32 %v45, 7
    %v47 = vsub.s32 0, %v46
    %v48 = vrot.slane %v43, %v47
    %v49 = vlaneseq
    %v50 = vshrl.u32 %v49, 7
    %v51 = vsub.s32 1, %v50
    %v52 = vrot.slane %v43, %v51
    %v63 = vunpack.c.l.b16 %v31
    %v64 = vunpack.c.l.b16 %v32
    %v65 = vunpack.c.l.b16 %v33
    %v66 = vunpack.c.l.b16 %v34
    %v67 = vunpack.c.l.b16 %v35
    %v68 = vunpack.c.l.b16 %v36
    %v69 = vunpack.c.l.b16 %v37
    %v70 = vunpack.c.l.b16 %v38
    %v71 = vpack.c.b16 %v64, %v63
    %v72 = vpack.c.b16 %v66, %v65
    %v73 = vpack.c.b16 %v68, %v67
    %v74 = vpack.c.b16 %v70, %v69
    %v79 = vunpack.c.l.b16 %v39
    %v80 = vunpack.c.h.b16 %v39
    %v81 = vunpack.c.l.b16 %v40
    %v82 = vunpack.c.h.b16 %v40
    %v83 = vunpack.c.l.b16 %v41
    %v84 = vunpack.c.h.b16 %v41
    %v85 = vunpack.c.l.b16 %v42
    %v86 = vunpack.c.h.b16 %v42
    %v87 = vpack.c.b16 %v81, %v79
    %v88 = vpack.c.b16 %v82, %v80
    %v89 = vpack.c.b16 %v85, %v83
    %v90 = vpack.c.b16 %v86, %v84
    %vm95 = vcmask 261120
    %v97 = vsel %vm95, %v71, 0
    %v100 = vsel %vm95, %v72, 0
    %v103 = vsel %vm95, %v73, 0
    %v106 = vsel %vm95, %v74, 0
    %108 = vmatprep.subr.bf16.mxu0 %v88
    %109 = vmatpush1.bf16.msra.mxu0 %v87
    %110 = vmatprep.subr.bf16.mxu0 %v90
    %111 = vmatpush1.bf16.msra.mxu0 %v89
    %112 = vmatprep.subr.bf16.mxu0 0
    %113 = vmatpush1.bf16.msra.mxu0 0
    %114 = vmatprep.subr.bf16.mxu0 0
    %115 = vmatpush1.bf16.msra.mxu0 0
    %116 = vmatprep.subr.bf16.mxu0 0
    %117 = vmatpush1.bf16.msra.mxu0 0
    %118 = vmatprep.subr.bf16.mxu0 0
    %119 = vmatpush1.bf16.msra.mxu0 0
    %120 = vmatprep.subr.bf16.mxu0 0
    %121 = vmatpush1.bf16.msra.mxu0 0
    %122 = vmatprep.subr.bf16.mxu0 0
    %123 = vmatpush1.bf16.msra.mxu0 0
    %124 = vmatprep.subr.bf16.mxu0 0
    %125 = vmatpush1.bf16.msra.mxu0 0
    %126 = vmatprep.subr.bf16.mxu0 0
    %127 = vmatpush1.bf16.msra.mxu0 0
    %128 = vmatprep.subr.bf16.mxu0 0
    %129 = vmatpush1.bf16.msra.mxu0 0
    %130 = vmatprep.subr.bf16.mxu0 0
    %131 = vmatpush1.bf16.msra.mxu0 0
    %132 = vmatprep.subr.bf16.mxu0 0
    %133 = vmatpush1.bf16.msra.mxu0 0
    %134 = vmatprep.subr.bf16.mxu0 0
    %135 = vmatpush1.bf16.msra.mxu0 0
    %136 = vmatprep.subr.bf16.mxu0 0
    %137 = vmatpush1.bf16.msra.mxu0 0
    %138 = vmatprep.subr.bf16.mxu0 0
    %139 = vmatpush1.bf16.msra.mxu0 0
    %140 = vmatprep.mubr.bf16.mxu0 0
    %141 = vmatmul.mubr.bf16.gmra.mrb[0].mxu0 %v97
    %v142 = vpop.f32.mrb[0].mxu0
    %v143 = vadd.f32 %v48, %v142
    %v144 = vpop.f32.mrb[0].mxu0
    %v145 = vadd.f32 %v52, %v144
    %v146 = vpop.f32.mrb[0].mxu0
    %v147 = vadd.f32 %v48, %v146
    %v148 = vpop.f32.mrb[0].mxu0
    %v149 = vadd.f32 %v52, %v148
    %150 = vmatprep.mubr.bf16.mxu0 0
    %151 = vmatmul.mubr.bf16.gmra.mrb[0].mxu0 %v100
    %v152 = vpop.f32.mrb[0].mxu0
    %v153 = vadd.f32 %v48, %v152
    %v154 = vpop.f32.mrb[0].mxu0
    %v155 = vadd.f32 %v52, %v154
    %v156 = vpop.f32.mrb[0].mxu0
    %v157 = vadd.f32 %v48, %v156
    %v158 = vpop.f32.mrb[0].mxu0
    %v159 = vadd.f32 %v52, %v158
    %160 = vmatprep.mubr.bf16.mxu0 0
    %161 = vmatmul.mubr.bf16.gmra.mrb[0].mxu0 %v103
    %v162 = vpop.f32.mrb[0].mxu0
    %v163 = vadd.f32 %v48, %v162
    %v164 = vpop.f32.mrb[0].mxu0
    %v165 = vadd.f32 %v52, %v164
    %v166 = vpop.f32.mrb[0].mxu0
    %v167 = vadd.f32 %v48, %v166
    %v168 = vpop.f32.mrb[0].mxu0
    %v169 = vadd.f32 %v52, %v168
    %170 = vmatprep.mubr.bf16.mxu0 0
    %171 = vmatmul.mubr.bf16.gmra.mrb[0].mxu0 %v106
    %v172 = vpop.f32.mrb[0].mxu0
    %v173 = vadd.f32 %v48, %v172
    %v174 = vpop.f32.mrb[0].mxu0
    %v175 = vadd.f32 %v52, %v174
    %v176 = vpop.f32.mrb[0].mxu0
    %v177 = vadd.f32 %v48, %v176
    %v178 = vpop.f32.mrb[0].mxu0
    %v179 = vadd.f32 %v52, %v178
    %180 = vdwg.mxu0
    %v181 = vmul.f32 %v143, %v143
    %v182 = vmul.f32 %v147, %v147
    %v183 = vmul.f32 %v153, %v153
    %v184 = vmul.f32 %v157, %v157
    %v185 = vmul.f32 %v163, %v163
    %v186 = vmul.f32 %v167, %v167
    %v187 = vmul.f32 %v173, %v173
    %v188 = vmul.f32 %v177, %v177
    %v189 = vmul.f32 %v143, %v181
    %v190 = vmul.f32 %v147, %v182
    %v191 = vmul.f32 %v153, %v183
    %v192 = vmul.f32 %v157, %v184
    %v193 = vmul.f32 %v163, %v185
    %v194 = vmul.f32 %v167, %v186
    %v195 = vmul.f32 %v173, %v187
    %v196 = vmul.f32 %v177, %v188
    %v197 = vmul.f32 %v189, 0.044715
    %v198 = vmul.f32 %v190, 0.044715
    %v199 = vmul.f32 %v191, 0.044715
    %v200 = vmul.f32 %v192, 0.044715
    %v201 = vmul.f32 %v193, 0.044715
    %v202 = vmul.f32 %v194, 0.044715
    %v203 = vmul.f32 %v195, 0.044715
    %v204 = vmul.f32 %v196, 0.044715
    %v205 = vadd.f32 %v143, %v197
    %v206 = vadd.f32 %v147, %v198
    %v207 = vadd.f32 %v153, %v199
    %v208 = vadd.f32 %v157, %v200
    %v209 = vadd.f32 %v163, %v201
    %v210 = vadd.f32 %v167, %v202
    %v211 = vadd.f32 %v173, %v203
    %v212 = vadd.f32 %v177, %v204
    %v213 = vmul.f32 %v205, 0.7978846
    %v214 = vmul.f32 %v206, 0.7978846
    %v215 = vmul.f32 %v207, 0.7978846
    %v216 = vmul.f32 %v208, 0.7978846
    %v217 = vmul.f32 %v209, 0.7978846
    %v218 = vmul.f32 %v210, 0.7978846
    %v219 = vmul.f32 %v211, 0.7978846
    %v220 = vmul.f32 %v212, 0.7978846
    %v221 = vtanh.pop %v213
    %v222 = vtanh.pop %v214
    %v223 = vtanh.pop %v215
    %v224 = vtanh.pop %v216
    %v225 = vtanh.pop %v217
    %v226 = vtanh.pop %v218
    %v227 = vtanh.pop %v219
    %v228 = vtanh.pop %v220
    %v229 = vadd.f32 %v221, 1.0
    %v230 = vadd.f32 %v222, 1.0
    %v231 = vadd.f32 %v223, 1.0
    %v232 = vadd.f32 %v224, 1.0
    %v233 = vadd.f32 %v225, 1.0
    %v234 = vadd.f32 %v226, 1.0
    %v235 = vadd.f32 %v227, 1.0
    %v236 = vadd.f32 %v228, 1.0
    %v237 = vmul.f32 %v229, 0.5
    %v238 = vmul.f32 %v230, 0.5
    %v239 = vmul.f32 %v231, 0.5
    %v240 = vmul.f32 %v232, 0.5
    %v241 = vmul.f32 %v233, 0.5
    %v242 = vmul.f32 %v234, 0.5
    %v243 = vmul.f32 %v235, 0.5
    %v244 = vmul.f32 %v236, 0.5
    %v245 = vmul.f32 %v143, %v237
    %v246 = vmul.f32 %v147, %v238
    %v247 = vmul.f32 %v153, %v239
    %v248 = vmul.f32 %v157, %v240
    %v249 = vmul.f32 %v163, %v241
    %v250 = vmul.f32 %v167, %v242
    %v251 = vmul.f32 %v173, %v243
    %v252 = vmul.f32 %v177, %v244
    %v253 = vmax.f32 %v145, 0.0
    %v254 = vmax.f32 %v149, 0.0
    %v255 = vmax.f32 %v155, 0.0
    %v256 = vmax.f32 %v159, 0.0
    %v257 = vmax.f32 %v165, 0.0
    %v258 = vmax.f32 %v169, 0.0
    %v259 = vmax.f32 %v175, 0.0
    %v260 = vmax.f32 %v179, 0.0
    %v261 = vpack.c.bf16 %v254, %v253
    %v262 = vpack.c.bf16 %v256, %v255
    %v263 = vpack.c.bf16 %v258, %v257
    %v264 = vpack.c.bf16 %v260, %v259
    %v265 = vld [vmem:[%s3] sm:$0xff]
    %v266 = vld [vmem:[%s3 + $0x8] sm:$0xff]
    %v267 = vld [vmem:[%s3 + $0x10] sm:$0xff]
    %v268 = vld [vmem:[%s3 + $0x18] sm:$0xff]
    %v269 = vld [vmem:[%s3 + $0x20] sm:$0xff]
    %v270 = vld [vmem:[%s3 + $0x28] sm:$0xff]
    %v271 = vld [vmem:[%s3 + $0x30] sm:$0xff]
    %v272 = vld [vmem:[%s3 + $0x38] sm:$0xff]
    %v273 = vld [vmem:[%s3 + $0x40] sm:$0xff]
    %v274 = vld [vmem:[%s3 + $0x48] sm:$0xff]
    %v275 = vld [vmem:[%s3 + $0x50] sm:$0xff]
    %v276 = vld [vmem:[%s3 + $0x58] sm:$0xff]
    %v277 = vld [vmem:[%s3 + $0x60] sm:$0xff]
    %v278 = vld [vmem:[%s3 + $0x68] sm:$0xff]
    %v279 = vld [vmem:[%s3 + $0x70] sm:$0xff]
    %v280 = vld [vmem:[%s3 + $0x78] sm:$0xff]
    %v281 = vld [vmem:[%s4] sm:$0x3]
    %v283 = vlaneseq
    %v284 = vshrl.u32 %v283, 7
    %v285 = vsub.s32 0, %v284
    %v286 = vrot.slane %v281, %v285
    %v287 = vlaneseq
    %v288 = vshrl.u32 %v287, 7
    %v289 = vsub.s32 1, %v288
    %v290 = vrot.slane %v281, %v289
    %v309 = vunpack.c.l.b16 %v265
    %v310 = vunpack.c.h.b16 %v265
    %v311 = vunpack.c.l.b16 %v266
    %v312 = vunpack.c.h.b16 %v266
    %v313 = vunpack.c.l.b16 %v267
    %v314 = vunpack.c.h.b16 %v267
    %v315 = vunpack.c.l.b16 %v268
    %v316 = vunpack.c.h.b16 %v268
    %v317 = vunpack.c.l.b16 %v269
    %v318 = vunpack.c.h.b16 %v269
    %v319 = vunpack.c.l.b16 %v270
    %v320 = vunpack.c.h.b16 %v270
    %v321 = vunpack.c.l.b16 %v271
    %v322 = vunpack.c.h.b16 %v271
    %v323 = vunpack.c.l.b16 %v272
    %v324 = vunpack.c.h.b16 %v272
    %v325 = vunpack.c.l.b16 %v273
    %v326 = vunpack.c.h.b16 %v273
    %v327 = vunpack.c.l.b16 %v274
    %v328 = vunpack.c.h.b16 %v274
    %v329 = vunpack.c.l.b16 %v275
    %v330 = vunpack.c.h.b16 %v275
    %v331 = vunpack.c.l.b16 %v276
    %v332 = vunpack.c.h.b16 %v276
    %v333 = vunpack.c.l.b16 %v277
    %v334 = vunpack.c.h.b16 %v277
    %v335 = vunpack.c.l.b16 %v278
    %v336 = vunpack.c.h.b16 %v278
    %v337 = vunpack.c.l.b16 %v279
    %v338 = vunpack.c.h.b16 %v279
    %v339 = vunpack.c.l.b16 %v280
    %v340 = vunpack.c.h.b16 %v280
    %v341 = vpack.c.b16 %v311, %v309
    %v342 = vpack.c.b16 %v312, %v310
    %v343 = vpack.c.b16 %v315, %v313
    %v344 = vpack.c.b16 %v316, %v314
    %v345 = vpack.c.b16 %v319, %v317
    %v346 = vpack.c.b16 %v320, %v318
    %v347 = vpack.c.b16 %v323, %v321
    %v348 = vpack.c.b16 %v324, %v322
    %v349 = vpack.c.b16 %v327, %v325
    %v350 = vpack.c.b16 %v328, %v326
    %v351 = vpack.c.b16 %v331, %v329
    %v352 = vpack.c.b16 %v332, %v330
    %v353 = vpack.c.b16 %v335, %v333
    %v354 = vpack.c.b16 %v336, %v334
    %v355 = vpack.c.b16 %v339, %v337
    %v356 = vpack.c.b16 %v340, %v338
    %373 = vmatprep.subr.bf16.mxu0 %v342
    %374 = vmatpush1.bf16.msra.mxu0 %v341
    %375 = vmatprep.subr.bf16.mxu0 %v344
    %376 = vmatpush1.bf16.msra.mxu0 %v343
    %377 = vmatprep.subr.bf16.mxu0 %v346
    %378 = vmatpush1.bf16.msra.mxu0 %v345
    %379 = vmatprep.subr.bf16.mxu0 %v348
    %380 = vmatpush1.bf16.msra.mxu0 %v347
    %381 = vmatprep.subr.bf16.mxu0 %v350
    %382 = vmatpush1.bf16.msra.mxu0 %v349
    %383 = vmatprep.subr.bf16.mxu0 %v352
    %384 = vmatpush1.bf16.msra.mxu0 %v351
    %385 = vmatprep.subr.bf16.mxu0 %v354
    %386 = vmatpush1.bf16.msra.mxu0 %v353
    %387 = vmatprep.subr.bf16.mxu0 %v356
    %388 = vmatpush1.bf16.msra.mxu0 %v355
    %389 = vmatprep.subr.bf16.mxu0 0
    %390 = vmatpush1.bf16.msra.mxu0 0
    %391 = vmatprep.subr.bf16.mxu0 0
    %392 = vmatpush1.bf16.msra.mxu0 0
    %393 = vmatprep.subr.bf16.mxu0 0
    %394 = vmatpush1.bf16.msra.mxu0 0
    %395 = vmatprep.subr.bf16.mxu0 0
    %396 = vmatpush1.bf16.msra.mxu0 0
    %397 = vmatprep.subr.bf16.mxu0 0
    %398 = vmatpush1.bf16.msra.mxu0 0
    %399 = vmatprep.subr.bf16.mxu0 0
    %400 = vmatpush1.bf16.msra.mxu0 0
    %401 = vmatprep.subr.bf16.mxu0 0
    %402 = vmatpush1.bf16.msra.mxu0 0
    %403 = vmatprep.subr.bf16.mxu0 0
    %404 = vmatpush1.bf16.msra.mxu0 0
    %405 = vmatprep.mubr.bf16.mxu0 0
    %406 = vmatmul.mubr.bf16.gmra.mrb[0].mxu0 %v261
    %v407 = vpop.f32.mrb[0].mxu0
    %v408 = vadd.f32 %v286, %v407
    %v409 = vpop.f32.mrb[0].mxu0
    %v410 = vadd.f32 %v290, %v409
    %v411 = vpop.f32.mrb[0].mxu0
    %v412 = vadd.f32 %v286, %v411
    %v413 = vpop.f32.mrb[0].mxu0
    %v414 = vadd.f32 %v290, %v413
    %415 = vmatprep.mubr.bf16.mxu0 0
    %416 = vmatmul.mubr.bf16.gmra.mrb[0].mxu0 %v262
    %v417 = vpop.f32.mrb[0].mxu0
    %v418 = vadd.f32 %v286, %v417
    %v419 = vpop.f32.mrb[0].mxu0
    %v420 = vadd.f32 %v290, %v419
    %v421 = vpop.f32.mrb[0].mxu0
    %v422 = vadd.f32 %v286, %v421
    %v423 = vpop.f32.mrb[0].mxu0
    %v424 = vadd.f32 %v290, %v423
    %425 = vmatprep.mubr.bf16.mxu0 0
    %426 = vmatmul.mubr.bf16.gmra.mrb[0].mxu0 %v263
    %v427 = vpop.f32.mrb[0].mxu0
    %v428 = vadd.f32 %v286, %v427
    %v429 = vpop.f32.mrb[0].mxu0
    %v430 = vadd.f32 %v290, %v429
    %v431 = vpop.f32.mrb[0].mxu0
    %v432 = vadd.f32 %v286, %v431
    %v433 = vpop.f32.mrb[0].mxu0
    %v434 = vadd.f32 %v290, %v433
    %435 = vmatprep.mubr.bf16.mxu0 0
    %436 = vmatmul.mubr.bf16.gmra.mrb[0].mxu0 %v264
    %v437 = vpop.f32.mrb[0].mxu0
    %v438 = vadd.f32 %v286, %v437
    %v439 = vpop.f32.mrb[0].mxu0
    %v440 = vadd.f32 %v290, %v439
    %v441 = vpop.f32.mrb[0].mxu0
    %v442 = vadd.f32 %v286, %v441
    %v443 = vpop.f32.mrb[0].mxu0
    %v444 = vadd.f32 %v290, %v443
    %445 = vdwg.mxu0
    %v446 = vxor.u32 %v408, 2147483648
    %v447 = vxor.u32 %v412, 2147483648
    %v448 = vxor.u32 %v418, 2147483648
    %v449 = vxor.u32 %v422, 2147483648
    %v450 = vxor.u32 %v428, 2147483648
    %v451 = vxor.u32 %v432, 2147483648
    %v452 = vxor.u32 %v438, 2147483648
    %v453 = vxor.u32 %v442, 2147483648
    %v454 = vmul.f32 %v446, 1.442695
    %v455 = vpow.pop %v454
    %v456 = vmul.f32 %v447, 1.442695
    %v457 = vpow.pop %v456
    %v458 = vmul.f32 %v448, 1.442695
    %v459 = vpow.pop %v458
    %v460 = vmul.f32 %v449, 1.442695
    %v461 = vpow.pop %v460
    %v462 = vmul.f32 %v450, 1.442695
    %v463 = vpow.pop %v462
    %v464 = vmul.f32 %v451, 1.442695
    %v465 = vpow.pop %v464
    %v466 = vmul.f32 %v452, 1.442695
    %v467 = vpow.pop %v466
    %v468 = vmul.f32 %v453, 1.442695
    %v469 = vpow.pop %v468
    %v470 = vadd.f32 %v455, 1.0
    %v471 = vadd.f32 %v457, 1.0
    %v472 = vadd.f32 %v459, 1.0
    %v473 = vadd.f32 %v461, 1.0
    %v474 = vadd.f32 %v463, 1.0
    %v475 = vadd.f32 %v465, 1.0
    %v476 = vadd.f32 %v467, 1.0
    %v477 = vadd.f32 %v469, 1.0
    %v478 = vrcp.pop %v470
    %v479 = vmul.f32 1.0, %v478
    %v480 = vrcp.pop %v471
    %v481 = vmul.f32 1.0, %v480
    %v482 = vrcp.pop %v472
    %v483 = vmul.f32 1.0, %v482
    %v484 = vrcp.pop %v473
    %v485 = vmul.f32 1.0, %v484
    %v486 = vrcp.pop %v474
    %v487 = vmul.f32 1.0, %v486
    %v488 = vrcp.pop %v475
    %v489 = vmul.f32 1.0, %v488
    %v490 = vrcp.pop %v476
    %v491 = vmul.f32 1.0, %v490
    %v492 = vrcp.pop %v477
    %v493 = vmul.f32 1.0, %v492
    %v494 = vxor.u32 %v410, 2147483648
    %v495 = vxor.u32 %v414, 2147483648
    %v496 = vxor.u32 %v420, 2147483648
    %v497 = vxor.u32 %v424, 2147483648
    %v498 = vxor.u32 %v430, 2147483648
    %v499 = vxor.u32 %v434, 2147483648
    %v500 = vxor.u32 %v440, 2147483648
    %v501 = vxor.u32 %v444, 2147483648
    %v502 = vmul.f32 %v494, 1.442695
    %v503 = vpow.pop %v502
    %v504 = vmul.f32 %v495, 1.442695
    %v505 = vpow.pop %v504
    %v506 = vmul.f32 %v496, 1.442695
    %v507 = vpow.pop %v506
    %v508 = vmul.f32 %v497, 1.442695
    %v509 = vpow.pop %v508
    %v510 = vmul.f32 %v498, 1.442695
    %v511 = vpow.pop %v510
    %v512 = vmul.f32 %v499, 1.442695
    %v513 = vpow.pop %v512
    %v514 = vmul.f32 %v500, 1.442695
    %v515 = vpow.pop %v514
    %v516 = vmul.f32 %v501, 1.442695
    %v517 = vpow.pop %v516
    %v518 = vadd.f32 %v503, 1.0
    %v519 = vadd.f32 %v505, 1.0
    %v520 = vadd.f32 %v507, 1.0
    %v521 = vadd.f32 %v509, 1.0
    %v522 = vadd.f32 %v511, 1.0
    %v523 = vadd.f32 %v513, 1.0
    %v524 = vadd.f32 %v515, 1.0
    %v525 = vadd.f32 %v517, 1.0
    %v526 = vrcp.pop %v518
    %v527 = vmul.f32 1.0, %v526
    %v528 = vrcp.pop %v519
    %v529 = vmul.f32 1.0, %v528
    %v530 = vrcp.pop %v520
    %v531 = vmul.f32 1.0, %v530
    %v532 = vrcp.pop %v521
    %v533 = vmul.f32 1.0, %v532
    %v534 = vrcp.pop %v522
    %v535 = vmul.f32 1.0, %v534
    %v536 = vrcp.pop %v523
    %v537 = vmul.f32 1.0, %v536
    %v538 = vrcp.pop %v524
    %v539 = vmul.f32 1.0, %v538
    %v540 = vrcp.pop %v525
    %v541 = vmul.f32 1.0, %v540
    %v542 = vld [vmem:[%s5] sm:$0x1]
    %v544 = vlaneseq
    %v545 = vshrl.u32 %v544, 7
    %v546 = vsub.s32 0, %v545
    %v547 = vrot.slane %v542, %v546
    %v549 = vmul.f32 %v547, %v479
    %v550 = vmul.f32 %v547, %v481
    %v551 = vmul.f32 %v547, %v483
    %v552 = vmul.f32 %v547, %v485
    %v553 = vmul.f32 %v547, %v487
    %v554 = vmul.f32 %v547, %v489
    %v555 = vmul.f32 %v547, %v491
    %v556 = vmul.f32 %v547, %v493
    %v557 = vmul.f32 %v549, 1.442695
    %v558 = vpow.pop %v557
    %v559 = vmul.f32 %v550, 1.442695
    %v560 = vpow.pop %v559
    %v561 = vmul.f32 %v551, 1.442695
    %v562 = vpow.pop %v561
    %v563 = vmul.f32 %v552, 1.442695
    %v564 = vpow.pop %v563
    %v565 = vmul.f32 %v553, 1.442695
    %v566 = vpow.pop %v565
    %v567 = vmul.f32 %v554, 1.442695
    %v568 = vpow.pop %v567
    %v569 = vmul.f32 %v555, 1.442695
    %v570 = vpow.pop %v569
    %v571 = vmul.f32 %v556, 1.442695
    %v572 = vpow.pop %v571
    %v573 = vmul.f32 %v558, %v558
    %v574 = vmul.f32 %v560, %v560
    %v575 = vmul.f32 %v562, %v562
    %v576 = vmul.f32 %v564, %v564
    %v577 = vmul.f32 %v566, %v566
    %v578 = vmul.f32 %v568, %v568
    %v579 = vmul.f32 %v570, %v570
    %v580 = vmul.f32 %v572, %v572
    %v581 = vsub.f32 1.0, %v573
    %v582 = vsub.f32 1.0, %v574
    %v583 = vsub.f32 1.0, %v575
    %v584 = vsub.f32 1.0, %v576
    %v585 = vsub.f32 1.0, %v577
    %v586 = vsub.f32 1.0, %v578
    %v587 = vsub.f32 1.0, %v579
    %v588 = vsub.f32 1.0, %v580
    %v589 = vmax.f32 %v581, 0.0
    %v590 = vmax.f32 %v582, 0.0
    %v591 = vmax.f32 %v583, 0.0
    %v592 = vmax.f32 %v584, 0.0
    %v593 = vmax.f32 %v585, 0.0
    %v594 = vmax.f32 %v586, 0.0
    %v595 = vmax.f32 %v587, 0.0
    %v596 = vmax.f32 %v588, 0.0
    %v597 = vrsqrt.pop %v589
    %v598 = vmul.f32 %v589, %v597
    %vm599 = vcmp.eq.f32.partialorder %v589, inf
    %v600 = vsel %vm599, %v589, %v598
    %vm601 = vcmp.eq.f32.partialorder %v589, 0.0
    %v602 = vand.u32 %v589, 2147483648
    %v603 = vsel %vm601, %v602, %v600
    %v604 = vrsqrt.pop %v590
    %v605 = vmul.f32 %v590, %v604
    %vm606 = vcmp.eq.f32.partialorder %v590, inf
    %v607 = vsel %vm606, %v590, %v605
    %vm608 = vcmp.eq.f32.partialorder %v590, 0.0
    %v609 = vand.u32 %v590, 2147483648
    %v610 = vsel %vm608, %v609, %v607
    %v611 = vrsqrt.pop %v591
    %v612 = vmul.f32 %v591, %v611
    %vm613 = vcmp.eq.f32.partialorder %v591, inf
    %v614 = vsel %vm613, %v591, %v612
    %vm615 = vcmp.eq.f32.partialorder %v591, 0.0
    %v616 = vand.u32 %v591, 2147483648
    %v617 = vsel %vm615, %v616, %v614
    %v618 = vrsqrt.pop %v592
    %v619 = vmul.f32 %v592, %v618
    %vm620 = vcmp.eq.f32.partialorder %v592, inf
    %v621 = vsel %vm620, %v592, %v619
    %vm622 = vcmp.eq.f32.partialorder %v592, 0.0
    %v623 = vand.u32 %v592, 2147483648
    %v624 = vsel %vm622, %v623, %v621
    %v625 = vrsqrt.pop %v593
    %v626 = vmul.f32 %v593, %v625
    %vm627 = vcmp.eq.f32.partialorder %v593, inf
    %v628 = vsel %vm627, %v593, %v626
    %vm629 = vcmp.eq.f32.partialorder %v593, 0.0
    %v630 = vand.u32 %v593, 2147483648
    %v631 = vsel %vm629, %v630, %v628
    %v632 = vrsqrt.pop %v594
    %v633 = vmul.f32 %v594, %v632
    %vm634 = vcmp.eq.f32.partialorder %v594, inf
    %v635 = vsel %vm634, %v594, %v633
    %vm636 = vcmp.eq.f32.partialorder %v594, 0.0
    %v637 = vand.u32 %v594, 2147483648
    %v638 = vsel %vm636, %v637, %v635
    %v639 = vrsqrt.pop %v595
    %v640 = vmul.f32 %v595, %v639
    %vm641 = vcmp.eq.f32.partialorder %v595, inf
    %v642 = vsel %vm641, %v595, %v640
    %vm643 = vcmp.eq.f32.partialorder %v595, 0.0
    %v644 = vand.u32 %v595, 2147483648
    %v645 = vsel %vm643, %v644, %v642
    %v646 = vrsqrt.pop %v596
    %v647 = vmul.f32 %v596, %v646
    %vm648 = vcmp.eq.f32.partialorder %v596, inf
    %v649 = vsel %vm648, %v596, %v647
    %vm650 = vcmp.eq.f32.partialorder %v596, 0.0
    %v651 = vand.u32 %v596, 2147483648
    %v652 = vsel %vm650, %v651, %v649
    %v653 = vmul.f32 %v527, %v253
    %v654 = vmul.f32 %v529, %v254
    %v655 = vmul.f32 %v531, %v255
    %v656 = vmul.f32 %v533, %v256
    %v657 = vmul.f32 %v535, %v257
    %v658 = vmul.f32 %v537, %v258
    %v659 = vmul.f32 %v539, %v259
    %v660 = vmul.f32 %v541, %v260
    %v661 = vmul.f32 %v603, %v653
    %v662 = vmul.f32 %v610, %v654
    %v663 = vmul.f32 %v617, %v655
    %v664 = vmul.f32 %v624, %v656
    %v665 = vmul.f32 %v631, %v657
    %v666 = vmul.f32 %v638, %v658
    %v667 = vmul.f32 %v645, %v659
    %v668 = vmul.f32 %v652, %v660
    %669 = vst [vmem:[#allocation2] sm:$0xff] %v558
    %670 = vst [vmem:[#allocation2 + $0x8] sm:$0xff] %v560
    %671 = vst [vmem:[#allocation2 + $0x10] sm:$0xff] %v562
    %672 = vst [vmem:[#allocation2 + $0x18] sm:$0xff] %v564
    %673 = vst [vmem:[#allocation2 + $0x20] sm:$0xff] %v566
    %674 = vst [vmem:[#allocation2 + $0x28] sm:$0xff] %v568
    %675 = vst [vmem:[#allocation2 + $0x30] sm:$0xff] %v570
    %676 = vst [vmem:[#allocation2 + $0x38] sm:$0xff] %v572
    %677 = vst [vmem:[#allocation3] sm:$0xff] %v661
    %678 = vst [vmem:[#allocation3 + $0x8] sm:$0xff] %v662
    %679 = vst [vmem:[#allocation3 + $0x10] sm:$0xff] %v663
    %680 = vst [vmem:[#allocation3 + $0x18] sm:$0xff] %v664
    %681 = vst [vmem:[#allocation3 + $0x20] sm:$0xff] %v665
    %682 = vst [vmem:[#allocation3 + $0x28] sm:$0xff] %v666
    %683 = vst [vmem:[#allocation3 + $0x30] sm:$0xff] %v667
    %684 = vst [vmem:[#allocation3 + $0x38] sm:$0xff] %v668
    %v685 = vlaneseq
    %v686 = vshrl.u32 %v685, 7
    %vm687 = vcmp.ge.s32.totalorder %v686, 1
    %vm688 = vcmp.ge.s32.totalorder %v686, 2
    %vm689 = vcmp.ge.s32.totalorder %v686, 4
    %v690 = vld [vmem:[#allocation2] sm:$0xff]
    %v691 = vld [vmem:[#allocation3] sm:$0xff]
    %v692 = vrot.slane %v690, 7
    %v693 = vsel %vm687, 1, 0
    %vm694 = vcmp.eq.s32.totalorder %v693, 1
    %v695 = vsel %vm694, %v692, 1.0
    %v696 = vrot.slane %v691, 7
    %v697 = vsel %vm694, %v696, 0.0
    %v698 = vmul.f32 %v690, %v697
    %v699 = vadd.f32 %v698, %v691
    %v700 = vmul.f32 %v690, %v695
    %v701 = vrot.slane %v700, 6
    %v702 = vsel %vm688, 1, 0
    %vm703 = vcmp.eq.s32.totalorder %v702, 1
    %v704 = vsel %vm703, %v701, 1.0
    %v705 = vrot.slane %v699, 6
    %v706 = vsel %vm703, %v705, 0.0
    %v707 = vmul.f32 %v700, %v706
    %v708 = vadd.f32 %v707, %v699
    %v709 = vmul.f32 %v700, %v704
    %v710 = vrot.slane %v709, 4
    %v711 = vsel %vm689, 1, 0
    %vm712 = vcmp.eq.s32.totalorder %v711, 1
    %v713 = vsel %vm712, %v710, 1.0
    %v714 = vrot.slane %v708, 4
    %v715 = vsel %vm712, %v714, 0.0
    %v716 = vmul.f32 %v709, %v715
    %v717 = vadd.f32 %v716, %v708
    %v718 = vmul.f32 %v709, %v713
    %v719 = vmul.f32 %v718, 0.0
    %v720 = vadd.f32 %v717, %v719
    %721 = vst [vmem:[#allocation4] sm:$0xff] %v720
    %s722 = scalar_lea.vmem [#allocation2], 16
    %v723 = vld [vmem:[%s722] sm:$0xff]
    %s724 = scalar_lea.vmem [#allocation3], 16
    %v725 = vld [vmem:[%s724] sm:$0xff]
    %v726 = vrot.slane %v723, 7
    %v727 = vsel %vm694, %v726, 1.0
    %v728 = vrot.slane %v725, 7
    %v729 = vsel %vm694, %v728, 0.0
    %v730 = vmul.f32 %v723, %v729
    %v731 = vadd.f32 %v730, %v725
    %v732 = vmul.f32 %v723, %v727
    %v733 = vrot.slane %v732, 6
    %v734 = vsel %vm703, %v733, 1.0
    %v735 = vrot.slane %v731, 6
    %v736 = vsel %vm703, %v735, 0.0
    %v737 = vmul.f32 %v732, %v736
    %v738 = vadd.f32 %v737, %v731
    %v739 = vmul.f32 %v732, %v734
    %v740 = vrot.slane %v739, 4
    %v741 = vsel %vm712, %v740, 1.0
    %v742 = vrot.slane %v738, 4
    %v743 = vsel %vm712, %v742, 0.0
    %v744 = vmul.f32 %v739, %v743
    %v745 = vadd.f32 %v744, %v738
    %v746 = vmul.f32 %v739, %v741
    %v747 = vmul.f32 %v746, 0.0
    %v748 = vadd.f32 %v745, %v747
    %s749 = scalar_lea.vmem [#allocation4], 16
    %750 = vst [vmem:[%s749] sm:$0xff] %v748
    %s751 = scalar_lea.vmem [#allocation2], 32
    %v752 = vld [vmem:[%s751] sm:$0xff]
    %s753 = scalar_lea.vmem [#allocation3], 32
    %v754 = vld [vmem:[%s753] sm:$0xff]
    %v755 = vrot.slane %v752, 7
    %v756 = vsel %vm694, %v755, 1.0
    %v757 = vrot.slane %v754, 7
    %v758 = vsel %vm694, %v757, 0.0
    %v759 = vmul.f32 %v752, %v758
    %v760 = vadd.f32 %v759, %v754
    %v761 = vmul.f32 %v752, %v756
    %v762 = vrot.slane %v761, 6
    %v763 = vsel %vm703, %v762, 1.0
    %v764 = vrot.slane %v760, 6
    %v765 = vsel %vm703, %v764, 0.0
    %v766 = vmul.f32 %v761, %v765
    %v767 = vadd.f32 %v766, %v760
    %v768 = vmul.f32 %v761, %v763
    %v769 = vrot.slane %v768, 4
    %v770 = vsel %vm712, %v769, 1.0
    %v771 = vrot.slane %v767, 4
    %v772 = vsel %vm712, %v771, 0.0
    %v773 = vmul.f32 %v768, %v772
    %v774 = vadd.f32 %v773, %v767
    %v775 = vmul.f32 %v768, %v770
    %v776 = vmul.f32 %v775, 0.0
    %v777 = vadd.f32 %v774, %v776
    %s778 = scalar_lea.vmem [#allocation4], 32
    %779 = vst [vmem:[%s778] sm:$0xff] %v777
    %s780 = scalar_lea.vmem [#allocation2], 48
    %v781 = vld [vmem:[%s780] sm:$0xff]
    %s782 = scalar_lea.vmem [#allocation3], 48
    %v783 = vld [vmem:[%s782] sm:$0xff]
    %v784 = vrot.slane %v781, 7
    %v785 = vsel %vm694, %v784, 1.0
    %v786 = vrot.slane %v783, 7
    %v787 = vsel %vm694, %v786, 0.0
    %v788 = vmul.f32 %v781, %v787
    %v789 = vadd.f32 %v788, %v783
    %v790 = vmul.f32 %v781, %v785
    %v791 = vrot.slane %v790, 6
    %v792 = vsel %vm703, %v791, 1.0
    %v793 = vrot.slane %v789, 6
    %v794 = vsel %vm703, %v793, 0.0
    %v795 = vmul.f32 %v790, %v794
    %v796 = vadd.f32 %v795, %v789
    %v797 = vmul.f32 %v790, %v792
    %v798 = vrot.slane %v797, 4
    %v799 = vsel %vm712, %v798, 1.0
    %v800 = vrot.slane %v796, 4
    %v801 = vsel %vm712, %v800, 0.0
    %v802 = vmul.f32 %v797, %v801
    %v803 = vadd.f32 %v802, %v796
    %v804 = vmul.f32 %v797, %v799
    %v805 = vmul.f32 %v804, 0.0
    %v806 = vadd.f32 %v803, %v805
    %s807 = scalar_lea.vmem [#allocation4], 48
    %808 = vst [vmem:[%s807] sm:$0xff] %v806
    %s809 = scalar_lea.vmem [#allocation2], 8
    %v810 = vld [vmem:[%s809] sm:$0xff]
    %s811 = scalar_lea.vmem [#allocation3], 8
    %v812 = vld [vmem:[%s811] sm:$0xff]
    %v813 = vrot.slane %v810, 7
    %v814 = vsel %vm694, %v813, 1.0
    %v815 = vrot.slane %v812, 7
    %v816 = vsel %vm694, %v815, 0.0
    %v817 = vmul.f32 %v810, %v816
    %v818 = vadd.f32 %v817, %v812
    %v819 = vmul.f32 %v810, %v814
    %v820 = vrot.slane %v819, 6
    %v821 = vsel %vm703, %v820, 1.0
    %v822 = vrot.slane %v818, 6
    %v823 = vsel %vm703, %v822, 0.0
    %v824 = vmul.f32 %v819, %v823
    %v825 = vadd.f32 %v824, %v818
    %v826 = vmul.f32 %v819, %v821
    %v827 = vrot.slane %v826, 4
    %v828 = vsel %vm712, %v827, 1.0
    %v829 = vrot.slane %v825, 4
    %v830 = vsel %vm712, %v829, 0.0
    %v831 = vmul.f32 %v826, %v830
    %v832 = vadd.f32 %v831, %v825
    %v833 = vmul.f32 %v826, %v828
    %v834 = vlaneseq
    %v835 = vshrl.u32 %v834, 7
    %v836 = vsub.s32 7, %v835
    %v837 = vrot.slane %v720, %v836
    %v838 = vmul.f32 %v833, %v837
    %v839 = vadd.f32 %v832, %v838
    %s840 = scalar_lea.vmem [#allocation4], 8
    %841 = vst [vmem:[%s840] sm:$0xff] %v839
    %s842 = scalar_lea.vmem [#allocation2], 24
    %v843 = vld [vmem:[%s842] sm:$0xff]
    %s844 = scalar_lea.vmem [#allocation3], 24
    %v845 = vld [vmem:[%s844] sm:$0xff]
    %v846 = vrot.slane %v843, 7
    %v847 = vsel %vm694, %v846, 1.0
    %v848 = vrot.slane %v845, 7
    %v849 = vsel %vm694, %v848, 0.0
    %v850 = vmul.f32 %v843, %v849
    %v851 = vadd.f32 %v850, %v845
    %v852 = vmul.f32 %v843, %v847
    %v853 = vrot.slane %v852, 6
    %v854 = vsel %vm703, %v853, 1.0
    %v855 = vrot.slane %v851, 6
    %v856 = vsel %vm703, %v855, 0.0
    %v857 = vmul.f32 %v852, %v856
    %v858 = vadd.f32 %v857, %v851
    %v859 = vmul.f32 %v852, %v854
    %v860 = vrot.slane %v859, 4
    %v861 = vsel %vm712, %v860, 1.0
    %v862 = vrot.slane %v858, 4
    %v863 = vsel %vm712, %v862, 0.0
    %v864 = vmul.f32 %v859, %v863
    %v865 = vadd.f32 %v864, %v858
    %v866 = vmul.f32 %v859, %v861
    %v867 = vlaneseq
    %v868 = vshrl.u32 %v867, 7
    %v869 = vsub.s32 7, %v868
    %v870 = vrot.slane %v748, %v869
    %v871 = vmul.f32 %v866, %v870
    %v872 = vadd.f32 %v865, %v871
    %s873 = scalar_lea.vmem [#allocation4], 24
    %874 = vst [vmem:[%s873] sm:$0xff] %v872
    %s875 = scalar_lea.vmem [#allocation2], 40
    %v876 = vld [vmem:[%s875] sm:$0xff]
    %s877 = scalar_lea.vmem [#allocation3], 40
    %v878 = vld [vmem:[%s877] sm:$0xff]
    %v879 = vrot.slane %v876, 7
    %v880 = vsel %vm694, %v879, 1.0
    %v881 = vrot.slane %v878, 7
    %v882 = vsel %vm694, %v881, 0.0
    %v883 = vmul.f32 %v876, %v882
    %v884 = vadd.f32 %v883, %v878
    %v885 = vmul.f32 %v876, %v880
    %v886 = vrot.slane %v885, 6
    %v887 = vsel %vm703, %v886, 1.0
    %v888 = vrot.slane %v884, 6
    %v889 = vsel %vm703, %v888, 0.0
    %v890 = vmul.f32 %v885, %v889
    %v891 = vadd.f32 %v890, %v884
    %v892 = vmul.f32 %v885, %v887
    %v893 = vrot.slane %v892, 4
    %v894 = vsel %vm712, %v893, 1.0
    %v895 = vrot.slane %v891, 4
    %v896 = vsel %vm712, %v895, 0.0
    %v897 = vmul.f32 %v892, %v896
    %v898 = vadd.f32 %v897, %v891
    %v899 = vmul.f32 %v892, %v894
    %v900 = vlaneseq
    %v901 = vshrl.u32 %v900, 7
    %v902 = vsub.s32 7, %v901
    %v903 = vrot.slane %v777, %v902
    %v904 = vmul.f32 %v899, %v903
    %v905 = vadd.f32 %v898, %v904
    %s906 = scalar_lea.vmem [#allocation4], 40
    %907 = vst [vmem:[%s906] sm:$0xff] %v905
    %s908 = scalar_lea.vmem [#allocation2], 56
    %v909 = vld [vmem:[%s908] sm:$0xff]
    %s910 = scalar_lea.vmem [#allocation3], 56
    %v911 = vld [vmem:[%s910] sm:$0xff]
    %v912 = vrot.slane %v909, 7
    %v913 = vsel %vm694, %v912, 1.0
    %v914 = vrot.slane %v911, 7
    %v915 = vsel %vm694, %v914, 0.0
    %v916 = vmul.f32 %v909, %v915
    %v917 = vadd.f32 %v916, %v911
    %v918 = vmul.f32 %v909, %v913
    %v919 = vrot.slane %v918, 6
    %v920 = vsel %vm703, %v919, 1.0
    %v921 = vrot.slane %v917, 6
    %v922 = vsel %vm703, %v921, 0.0
    %v923 = vmul.f32 %v918, %v922
    %v924 = vadd.f32 %v923, %v917
    %v925 = vmul.f32 %v918, %v920
    %v926 = vrot.slane %v925, 4
    %v927 = vsel %vm712, %v926, 1.0
    %v928 = vrot.slane %v924, 4
    %v929 = vsel %vm712, %v928, 0.0
    %v930 = vmul.f32 %v925, %v929
    %v931 = vadd.f32 %v930, %v924
    %v932 = vmul.f32 %v925, %v927
    %v933 = vlaneseq
    %v934 = vshrl.u32 %v933, 7
    %v935 = vsub.s32 7, %v934
    %v936 = vrot.slane %v806, %v935
    %v937 = vmul.f32 %v932, %v936
    %v938 = vadd.f32 %v931, %v937
    %s939 = scalar_lea.vmem [#allocation4], 56
    %940 = vst [vmem:[%s939] sm:$0xff] %v938
    %v941 = vld [vmem:[#allocation4] sm:$0xff]
    %v942 = vld [vmem:[#allocation4 + $0x8] sm:$0xff]
    %v943 = vld [vmem:[#allocation4 + $0x10] sm:$0xff]
    %v944 = vld [vmem:[#allocation4 + $0x18] sm:$0xff]
    %v945 = vld [vmem:[#allocation4 + $0x20] sm:$0xff]
    %v946 = vld [vmem:[#allocation4 + $0x28] sm:$0xff]
    %v947 = vld [vmem:[#allocation4 + $0x30] sm:$0xff]
    %v948 = vld [vmem:[#allocation4 + $0x38] sm:$0xff]
    %v949 = vmul.f32 %v245, %v941
    %v950 = vmul.f32 %v246, %v942
    %v951 = vmul.f32 %v247, %v943
    %v952 = vmul.f32 %v248, %v944
    %v953 = vmul.f32 %v249, %v945
    %v954 = vmul.f32 %v250, %v946
    %v955 = vmul.f32 %v251, %v947
    %v956 = vmul.f32 %v252, %v948
    %v957 = vpack.c.bf16 %v950, %v949
    %v958 = vpack.c.bf16 %v952, %v951
    %v959 = vpack.c.bf16 %v954, %v953
    %v960 = vpack.c.bf16 %v956, %v955
    %v961 = vld [vmem:[%s6] sm:$0xf]
    %v962 = vld [vmem:[%s6 + $0x4] sm:$0xf]
    %v963 = vld [vmem:[%s6 + $0x8] sm:$0xf]
    %v964 = vld [vmem:[%s6 + $0xc] sm:$0xf]
    %v965 = vld [vmem:[%s6 + $0x10] sm:$0xf]
    %v966 = vld [vmem:[%s6 + $0x14] sm:$0xf]
    %v967 = vld [vmem:[%s6 + $0x18] sm:$0xf]
    %v968 = vld [vmem:[%s6 + $0x1c] sm:$0xf]
    %v969 = vld [vmem:[%s6 + $0x20] sm:$0xf]
    %v970 = vld [vmem:[%s6 + $0x24] sm:$0xf]
    %v971 = vld [vmem:[%s6 + $0x28] sm:$0xf]
    %v972 = vld [vmem:[%s6 + $0x2c] sm:$0xf]
    %v973 = vld [vmem:[%s6 + $0x30] sm:$0xf]
    %v974 = vld [vmem:[%s6 + $0x34] sm:$0xf]
    %v975 = vld [vmem:[%s6 + $0x38] sm:$0xf]
    %v976 = vld [vmem:[%s6 + $0x3c] sm:$0xf]
    %v977 = vld [vmem:[%s7] sm:$0x1]
    %v979 = vlaneseq
    %v980 = vshrl.u32 %v979, 7
    %v981 = vsub.s32 0, %v980
    %v982 = vrot.slane %v977, %v981
    %v1000 = vunpack.c.l.b16 %v961
    %v1001 = vunpack.c.l.b16 %v962
    %v1002 = vunpack.c.l.b16 %v963
    %v1003 = vunpack.c.l.b16 %v964
    %v1004 = vunpack.c.l.b16 %v965
    %v1005 = vunpack.c.l.b16 %v966
    %v1006 = vunpack.c.l.b16 %v967
    %v1007 = vunpack.c.l.b16 %v968
    %v1008 = vunpack.c.l.b16 %v969
    %v1009 = vunpack.c.l.b16 %v970
    %v1010 = vunpack.c.l.b16 %v971
    %v1011 = vunpack.c.l.b16 %v972
    %v1012 = vunpack.c.l.b16 %v973
    %v1013 = vunpack.c.l.b16 %v974
    %v1014 = vunpack.c.l.b16 %v975
    %v1015 = vunpack.c.l.b16 %v976
    %v1016 = vpack.c.b16 %v1001, %v1000
    %v1017 = vpack.c.b16 %v1003, %v1002
    %v1018 = vpack.c.b16 %v1005, %v1004
    %v1019 = vpack.c.b16 %v1007, %v1006
    %v1020 = vpack.c.b16 %v1009, %v1008
    %v1021 = vpack.c.b16 %v1011, %v1010
    %v1022 = vpack.c.b16 %v1013, %v1012
    %v1023 = vpack.c.b16 %v1015, %v1014
    %1032 = vmatprep.subr.bf16.mxu0 0
    %1033 = vmatpush1.bf16.msra.mxu0 %v1016
    %1034 = vmatprep.subr.bf16.mxu0 0
    %1035 = vmatpush1.bf16.msra.mxu0 %v1017
    %1036 = vmatprep.subr.bf16.mxu0 0
    %1037 = vmatpush1.bf16.msra.mxu0 %v1018
    %1038 = vmatprep.subr.bf16.mxu0 0
    %1039 = vmatpush1.bf16.msra.mxu0 %v1019
    %1040 = vmatprep.subr.bf16.mxu0 0
    %1041 = vmatpush1.bf16.msra.mxu0 %v1020
    %1042 = vmatprep.subr.bf16.mxu0 0
    %1043 = vmatpush1.bf16.msra.mxu0 %v1021
    %1044 = vmatprep.subr.bf16.mxu0 0
    %1045 = vmatpush1.bf16.msra.mxu0 %v1022
    %1046 = vmatprep.subr.bf16.mxu0 0
    %1047 = vmatpush1.bf16.msra.mxu0 %v1023
    %1048 = vmatprep.subr.bf16.mxu0 0
    %1049 = vmatpush1.bf16.msra.mxu0 0
    %1050 = vmatprep.subr.bf16.mxu0 0
    %1051 = vmatpush1.bf16.msra.mxu0 0
    %1052 = vmatprep.subr.bf16.mxu0 0
    %1053 = vmatpush1.bf16.msra.mxu0 0
    %1054 = vmatprep.subr.bf16.mxu0 0
    %1055 = vmatpush1.bf16.msra.mxu0 0
    %1056 = vmatprep.subr.bf16.mxu0 0
    %1057 = vmatpush1.bf16.msra.mxu0 0
    %1058 = vmatprep.subr.bf16.mxu0 0
    %1059 = vmatpush1.bf16.msra.mxu0 0
    %1060 = vmatprep.subr.bf16.mxu0 0
    %1061 = vmatpush1.bf16.msra.mxu0 0
    %1062 = vmatprep.subr.bf16.mxu0 0
    %1063 = vmatpush1.bf16.msra.mxu0 0
    %1064 = vmatprep.mubr.bf16.mxu0 0
    %1065 = vmatmul.mubr.bf16.gmra.mrb[0].mxu0 %v957
    %v1066 = vpop.f32.mrb[0].mxu0
    %v1067 = vadd.f32 %v982, %v1066
    %v1068 = vpop.f32.mrb[0].mxu0
    %v1069 = vpop.f32.mrb[0].mxu0
    %v1070 = vadd.f32 %v982, %v1069
    %v1071 = vpop.f32.mrb[0].mxu0
    %1072 = vmatprep.mubr.bf16.mxu0 0
    %1073 = vmatmul.mubr.bf16.gmra.mrb[0].mxu0 %v958
    %v1074 = vpop.f32.mrb[0].mxu0
    %v1075 = vadd.f32 %v982, %v1074
    %v1076 = vpop.f32.mrb[0].mxu0
    %v1077 = vpop.f32.mrb[0].mxu0
    %v1078 = vadd.f32 %v982, %v1077
    %v1079 = vpop.f32.mrb[0].mxu0
    %1080 = vmatprep.mubr.bf16.mxu0 0
    %1081 = vmatmul.mubr.bf16.gmra.mrb[0].mxu0 %v959
    %v1082 = vpop.f32.mrb[0].mxu0
    %v1083 = vadd.f32 %v982, %v1082
    %v1084 = vpop.f32.mrb[0].mxu0
    %v1085 = vpop.f32.mrb[0].mxu0
    %v1086 = vadd.f32 %v982, %v1085
    %v1087 = vpop.f32.mrb[0].mxu0
    %1088 = vmatprep.mubr.bf16.mxu0 0
    %1089 = vmatmul.mubr.bf16.gmra.mrb[0].mxu0 %v960
    %v1090 = vpop.f32.mrb[0].mxu0
    %v1091 = vadd.f32 %v982, %v1090
    %v1092 = vpop.f32.mrb[0].mxu0
    %v1093 = vpop.f32.mrb[0].mxu0
    %v1094 = vadd.f32 %v982, %v1093
    %v1095 = vpop.f32.mrb[0].mxu0
    %1096 = vdwg.mxu0
    %1097 = vst.msk [vmem:[#allocation5] sm:$0xff] %vm95, %v1067
    %1098 = vst.msk [vmem:[#allocation5 + $0x8] sm:$0xff] %vm95, %v1070
    %1099 = vst.msk [vmem:[#allocation5 + $0x10] sm:$0xff] %vm95, %v1075
    %1100 = vst.msk [vmem:[#allocation5 + $0x18] sm:$0xff] %vm95, %v1078
    %1101 = vst.msk [vmem:[#allocation5 + $0x20] sm:$0xff] %vm95, %v1083
    %1102 = vst.msk [vmem:[#allocation5 + $0x28] sm:$0xff] %vm95, %v1086
    %1103 = vst.msk [vmem:[#allocation5 + $0x30] sm:$0xff] %vm95, %v1091
    %1104 = vst.msk [vmem:[#allocation5 + $0x38] sm:$0xff] %vm95, %v1094
    // Predicated region
    $region34: #{recurrent_block_forward.1} parent=1 // pred_check
      _
    $region35: #{recurrent_block_forward.1} parent=1 // pred_check_branch
      %1106 = sbr.rel (0) target = $region37
    $region36: #{recurrent_block_forward.1} parent=1 // pred_region
      %s1108 = ssub.s32 1024, 1024
      %1109 = vsyncadd [#allocation6], %s1108
      %s1110 = sshll.u32 [#allocation5], 4
      %s1111 = int_to_ptr.vmem [resolvable:$true] %s1110
      %1116 = dma.vmem_to_hbm [thread:$0]  %s1111, 1024, %s8, [#allocation6], 128, 128, 8
    $region37: #{recurrent_block_forward.1} parent=1 // pred_fallthru
      _
    // Predicated region
    $region38: #{recurrent_block_forward.1} parent=1 // pred_check
      _
    $region39: #{recurrent_block_forward.1} parent=1 // pred_check_branch
      %1118 = sbr.rel (0) target = $region41
    $region40: #{recurrent_block_forward.1} parent=1 // pred_region
      %1119 = dma.done [#allocation6], 1024
    $region41: #{recurrent_block_forward.1} parent=1 // pred_fallthru
      _
    %1120 = vsyncpa [#allocation6], 1

</llo_original>
